<compile_context>
chip_gen: v6e
topology: v6e:2x2x1
jax: 0.10.0
libtpu: 0.0.40
codegen_flags: <defaults>
</compile_context>

<pallas_src>
import functools

import jax
import jax.numpy as jnp
from jax.experimental import pallas as pl
from jax.experimental.pallas import tpu as pltpu


def _vmem_specs(n):
    return [pl.BlockSpec(memory_space=pltpu.MemorySpace.VMEM) for _ in range(n)]


# ----------------------------- fused Pallas kernel -------------------------------- #

def fused_gat_kernel(*refs, layer_meta, row_tile):
    """Node-embedding Linear + all GAT layers + pooling + MLP head, fully fused.

    refs = (x, emb_w, emb_b, neg_bias, eattr,
            [w, adst_mat, asrc_matT, ec, b] * depth,
            pool_mat, age, age_w, age_b, g_onehot, gender_table,
            c1_w_pool, c1_w_age, c1_w_gen, c1_b, c2_w, c2_b, c3_w, c3_b,
            logits_out, hbuf_scratch)
    layer_meta = tuple of (heads, channels, apply_relu) per layer (static).
    """
    n_layers = len(layer_meta)
    x_ref, emb_w_ref, emb_b_ref, nbias_ref, eattr_ref = refs[:5]
    layer_refs = refs[5:5 + 5 * n_layers]
    (pool_ref, age_ref, agew_ref, ageb_ref, g1h_ref, gtab_ref,
     c1wp_ref, c1wa_ref, c1wg_ref, c1b_ref, c2w_ref, c2b_ref,
     c3w_ref, c3b_ref) = refs[5 + 5 * n_layers:5 + 5 * n_layers + 14]
    o_ref = refs[-2]
    hbuf = refs[-1]                                     # [N, W] f32 scratch

    N = x_ref.shape[0]

    # --- node embedding Linear (bf16 MXU operands, f32 accumulation) ---
    h = (jnp.dot(x_ref[...].astype(jnp.bfloat16),
                 emb_w_ref[...].astype(jnp.bfloat16),
                 preferred_element_type=jnp.float32) + emb_b_ref[...])

    # --- GAT layers ---
    for li, (H, C, relu) in enumerate(layer_meta):
        w_ref, adst_ref, asrcT_ref, ec_ref, b_ref = layer_refs[5 * li:5 * li + 5]
        w = w_ref[...].astype(jnp.bfloat16)             # [in_f, H*C]
        ec = ec_ref[...]                                # [1, H] f32
        b = b_ref[...]                                  # [1, H*C] f32
        HC = H * C

        z = jnp.dot(h.astype(jnp.bfloat16), w,
                    preferred_element_type=jnp.float32)          # [N, H*C] f32
        z_b = z.astype(jnp.bfloat16)
        # Batched per-head attention scores via block-diagonal attention matrices.
        ad = jnp.dot(z_b, adst_ref[...].astype(jnp.bfloat16),
                     preferred_element_type=jnp.float32)         # [N, H]  dst score
        asT = jax.lax.dot_general(asrcT_ref[...].astype(jnp.bfloat16), z_b,
                                  (((1,), (1,)), ((), ())),
                                  preferred_element_type=jnp.float32)  # [H, N] src

        # Row-block tiled softmax + aggregation into the VMEM scratch: peak [N,N]
        # temporaries are capped at [row_tile, N].
        for r0 in range(0, N, row_tile):
            r1 = min(r0 + row_tile, N)
            nb_blk = nbias_ref[r0:r1, :].astype(jnp.float32)     # additive mask (0/-1e30)
            ea_blk = eattr_ref[r0:r1, :].astype(jnp.float32)     # scalar edge attr
            head_outs = []
            for hh in range(H):
                # e[i, j] = a_dst(i) + a_src(j) + ec_h * edge_attr(i, j)
                e = ad[r0:r1, hh:hh + 1] + asT[hh:hh + 1, :] + ec[0, hh] * ea_blk
                e = jnp.maximum(e, 0.2 * e)                      # leaky_relu(0.2)
                e = e + nb_blk                                   # mask non-edges
                m = jnp.max(e, axis=-1, keepdims=True)
                p = jnp.exp(e - m)                               # masked -> exp(-big) = 0
                denom = jnp.maximum(jnp.sum(p, axis=-1, keepdims=True), 1e-20)
                attn = (p * pl.reciprocal(denom, approx=True)).astype(jnp.bfloat16)
                zh = z_b[:, hh * C:(hh + 1) * C]                 # [N, C] bf16
                head_outs.append(jnp.dot(attn, zh, preferred_element_type=jnp.float32))
            out_blk = head_outs[0] if H == 1 else jnp.concatenate(head_outs, axis=-1)
            out_blk = out_blk + b                                # bias once per block
            if relu:
                out_blk = jnp.maximum(out_blk, 0.0)
            hbuf[r0:r1, 0:HC] = out_blk
        h = hbuf[:, 0:HC]                                        # next-layer input

    # --- fused tail: global_mean_pool + age/gender embeddings + MLP head ---
    pooled = jnp.dot(pool_ref[...], h, preferred_element_type=jnp.float32)
    age_emb = jnp.dot(age_ref[...], agew_ref[...],
                      preferred_element_type=jnp.float32) + ageb_ref[...]
    gen_emb = jnp.dot(g1h_ref[...], gtab_ref[...], preferred_element_type=jnp.float32)
    # concat([pooled, age_emb, gen_emb]) @ c1_w == sum of three partial matmuls
    zc = (jnp.dot(pooled, c1wp_ref[...], preferred_element_type=jnp.float32)
          + jnp.dot(age_emb, c1wa_ref[...], preferred_element_type=jnp.float32)
          + jnp.dot(gen_emb, c1wg_ref[...], preferred_element_type=jnp.float32)
          + c1b_ref[...])
    zc = jnp.maximum(zc, 0.0)
    zc = jnp.maximum(jnp.dot(zc, c2w_ref[...], preferred_element_type=jnp.float32)
                     + c2b_ref[...], 0.0)
    o_ref[...] = jnp.dot(zc, c3w_ref[...], preferred_element_type=jnp.float32) + c3b_ref[...]


# --------------------------------- glue ------------------------------------------ #

def dense_graph(edge_index, edge_attr, N):
    """Dense additive attention mask / edge-attr with PyG-style self loops ('mean').

    Returns bf16 arrays so the [N,N] residents in VMEM are half-size.
    """
    src, dst = edge_index[0], edge_index[1]
    adj0 = jnp.zeros((N, N), jnp.float32).at[dst, src].set(1.0)
    e0 = jnp.zeros((N, N), jnp.float32).at[dst, src].set(edge_attr[:, 0])
    diag = jnp.eye(N, dtype=jnp.float32)
    adj0 = adj0 * (1.0 - diag)            # GATConv removes existing self loops
    e0 = e0 * (1.0 - diag)
    deg = jnp.sum(adj0, axis=1)
    loop_attr = jnp.where(deg > 0, jnp.sum(adj0 * e0, axis=1) / jnp.maximum(deg, 1.0), 0.0)
    adj = adj0 + diag                     # re-add self loops
    eattr = (e0 + jnp.diag(loop_attr)).astype(jnp.bfloat16)
    neg_bias = jnp.where(adj > 0.0, 0.0, -1e30).astype(jnp.bfloat16)   # additive mask
    return neg_bias, eattr


def init_params(key, hidden_dim, num_node_features, num_classes, depth):
    H = 2
    out_dim = hidden_dim * 2
    keys = iter(jax.random.split(key, 64))

    def dense(shape):
        return jax.random.normal(next(keys), shape, jnp.float32) * 0.1

    p = {}
    p["emb_w"] = dense((num_node_features, out_dim))
    p["emb_b"] = dense((out_dim,))
    layers = []
    in_f = out_dim
    for i in range(depth):
        last = i == depth - 1
        heads = 1 if last else H
        out_f = out_dim if last else hidden_dim
        w = dense((in_f, heads * out_f))
        asrc = dense((heads, out_f))
        adst = dense((heads, out_f))
        w_edge = dense((heads * out_f,))          # lin_edge: Linear(1, heads*out_f, bias=False)
        a_edge = dense((heads, out_f))            # att_edge
        bias = dense((heads * out_f,))
        # edge attention collapses to: alpha_edge = edge_attr * ec[h]
        ec = jnp.sum(w_edge.reshape(heads, out_f) * a_edge, axis=-1).reshape(1, heads)
        # block-diagonal attention matrices so all heads' scores come from ONE matmul
        adst_mat = jnp.zeros((heads * out_f, heads), jnp.float32)
        asrc_matT = jnp.zeros((heads, heads * out_f), jnp.float32)
        for hh in range(heads):
            adst_mat = adst_mat.at[hh * out_f:(hh + 1) * out_f, hh].set(adst[hh])
            asrc_matT = asrc_matT.at[hh, hh * out_f:(hh + 1) * out_f].set(asrc[hh])
        layers.append(dict(w=w, adst_mat=adst_mat, asrc_matT=asrc_matT, ec=ec, b=bias,
                           heads=heads, C=out_f, relu=not last))
        in_f = heads * out_f
    p["layers"] = layers
    p["age_w"] = dense((1, out_dim))
    p["age_b"] = dense((out_dim,))
    p["gender_table"] = dense((2, out_dim))
    dim_before = out_dim * 3                      # mode == 'Fusion'
    h2, h4 = hidden_dim // 2, hidden_dim // 4
    c1_w = dense((dim_before, h2))
    p["c1_w_pool"] = c1_w[:out_dim]               # pre-split so the kernel needs no concat
    p["c1_w_age"] = c1_w[out_dim:2 * out_dim]
    p["c1_w_gen"] = c1_w[2 * out_dim:]
    p["c1_b"] = dense((h2,))
    p["c2_w"], p["c2_b"] = dense((h2, h4)), dense((h4,))
    p["c3_w"], p["c3_b"] = dense((h4, num_classes)), dense((num_classes,))
    return p


def larger_gat_forward(params, x, edge_index, edge_attr, batch, age, gender, num_graphs):
    # mode == 'Fusion' path.  Dropout / edge-dropout are identity in eval mode.
    N = x.shape[0]
    neg_bias, eattr = dense_graph(edge_index, edge_attr, N)

    layer_meta = tuple((lp["heads"], lp["C"], lp["relu"]) for lp in params["layers"])
    W = max(h * c for (h, c, _) in layer_meta)          # widest layer output
    num_classes = params["c3_w"].shape[1]

    # pooling / categorical inputs as dense matmul operands
    onehot = (batch[None, :] == jnp.arange(num_graphs)[:, None]).astype(jnp.float32)
    counts = jnp.maximum(jnp.sum(onehot, axis=1, keepdims=True), 1.0)
    pool_mat = onehot / counts                          # global_mean_pool as a matmul
    g_onehot = jax.nn.one_hot(gender, 2, dtype=jnp.float32)

    inputs = [x.astype(jnp.float32), params["emb_w"],
              params["emb_b"].reshape(1, -1), neg_bias, eattr]
    for lp in params["layers"]:
        inputs += [lp["w"], lp["adst_mat"], lp["asrc_matT"], lp["ec"],
                   lp["b"].reshape(1, -1)]
    inputs += [pool_mat, age[:, None].astype(jnp.float32),
               params["age_w"], params["age_b"].reshape(1, -1),
               g_onehot, params["gender_table"],
               params["c1_w_pool"], params["c1_w_age"], params["c1_w_gen"],
               params["c1_b"].reshape(1, -1),
               params["c2_w"], params["c2_b"].reshape(1, -1),
               params["c3_w"], params["c3_b"].reshape(1, -1)]

    # Row tile for the softmax phase: caps [N,N]-shaped live temporaries at [TR,N].
    row_tile = N if N <= 256 else 256

    # VMEM budget sized to actual residency (inputs + scratch + row-block temporaries).
    in_bytes = sum(int(a.size) * a.dtype.itemsize for a in inputs)
    out_bytes = num_graphs * num_classes * 4
    scratch_bytes = N * W * 4
    tmp_bytes = 8 * row_tile * N * 4 + 6 * N * W * 4
    vmem_limit = int(min(100 << 20,
                         max(4 << 20, 2 * in_bytes + out_bytes + scratch_bytes
                             + tmp_bytes + (2 << 20))))

    logits = pl.pallas_call(
        functools.partial(fused_gat_kernel, layer_meta=layer_meta, row_tile=row_tile),
        out_shape=jax.ShapeDtypeStruct((num_graphs, num_classes), jnp.float32),
        in_specs=_vmem_specs(len(inputs)),
        out_specs=pl.BlockSpec(memory_space=pltpu.MemorySpace.VMEM),
        scratch_shapes=[pltpu.VMEM((N, W), jnp.float32)],
        compiler_params=pltpu.CompilerParams(vmem_limit_bytes=vmem_limit),
    )(*inputs)
    return logits


if __name__ == "__main__":
    hidden_dim, depth = 8, 2
    num_node_features, num_classes = 4, 3
    nodes_per_graph, num_graphs = 8, 2
    N = nodes_per_graph * num_graphs

    key = jax.random.PRNGKey(0)
    k_feat, k_attr, k_age, k_param = jax.random.split(key, 4)

    x = jax.random.normal(k_feat, (N, num_node_features), jnp.float32)

    # deterministic graph: per-graph bidirectional ring + skip-3 edges (no duplicates)
    src_list, dst_list = [], []
    for g in range(num_graphs):
        base = g * nodes_per_graph
        for i in range(nodes_per_graph):
            j = (i + 1) % nodes_per_graph
            src_list += [base + i, base + j]
            dst_list += [base + j, base + i]
            j2 = (i + 3) % nodes_per_graph
            src_list.append(base + i)
            dst_list.append(base + j2)
    edge_index = jnp.array([src_list, dst_list], dtype=jnp.int32)
    E = edge_index.shape[1]
    edge_attr = jax.random.normal(k_attr, (E, 1), jnp.float32)

    batch = jnp.repeat(jnp.arange(num_graphs, dtype=jnp.int32), nodes_per_graph)
    age = jax.random.normal(k_age, (num_graphs,), jnp.float32)
    gender = jnp.array([0, 1], dtype=jnp.int32)

    params = init_params(k_param, hidden_dim, num_node_features, num_classes, depth)

    out = larger_gat_forward(params, x, edge_index, edge_attr, batch, age, gender, num_graphs)
    out = jax.block_until_ready(out)
    assert out.shape == (num_graphs, num_classes)
    print("KERNEL_OK")
</pallas_src>

<mosaic_0001>
module attributes {stable_mosaic.version = 11 : i64} {
  func.func @fused_gat_kernel(%arg0: memref<16x4xf32, #tpu.memory_space<vmem>>, %arg1: memref<4x16xf32, #tpu.memory_space<vmem>>, %arg2: memref<1x16xf32, #tpu.memory_space<vmem>>, %arg3: memref<16x16xbf16, #tpu.memory_space<vmem>>, %arg4: memref<16x16xbf16, #tpu.memory_space<vmem>>, %arg5: memref<16x16xf32, #tpu.memory_space<vmem>>, %arg6: memref<16x2xf32, #tpu.memory_space<vmem>>, %arg7: memref<2x16xf32, #tpu.memory_space<vmem>>, %arg8: memref<1x2xf32, #tpu.memory_space<vmem>>, %arg9: memref<1x16xf32, #tpu.memory_space<vmem>>, %arg10: memref<16x16xf32, #tpu.memory_space<vmem>>, %arg11: memref<16x1xf32, #tpu.memory_space<vmem>>, %arg12: memref<1x16xf32, #tpu.memory_space<vmem>>, %arg13: memref<1x1xf32, #tpu.memory_space<vmem>>, %arg14: memref<1x16xf32, #tpu.memory_space<vmem>>, %arg15: memref<2x16xf32, #tpu.memory_space<vmem>>, %arg16: memref<2x1xf32, #tpu.memory_space<vmem>>, %arg17: memref<1x16xf32, #tpu.memory_space<vmem>>, %arg18: memref<1x16xf32, #tpu.memory_space<vmem>>, %arg19: memref<2x2xf32, #tpu.memory_space<vmem>>, %arg20: memref<2x16xf32, #tpu.memory_space<vmem>>, %arg21: memref<16x4xf32, #tpu.memory_space<vmem>>, %arg22: memref<16x4xf32, #tpu.memory_space<vmem>>, %arg23: memref<16x4xf32, #tpu.memory_space<vmem>>, %arg24: memref<1x4xf32, #tpu.memory_space<vmem>>, %arg25: memref<4x2xf32, #tpu.memory_space<vmem>>, %arg26: memref<1x2xf32, #tpu.memory_space<vmem>>, %arg27: memref<2x3xf32, #tpu.memory_space<vmem>>, %arg28: memref<1x3xf32, #tpu.memory_space<vmem>>, %arg29: memref<2x3xf32, #tpu.memory_space<vmem>>, %arg30: memref<16x16xf32, #tpu.memory_space<vmem>>) attributes {dimension_semantics = [], scalar_prefetch = 0 : i64, scratch_operands = 1 : i64, tpu.core_type = #tpu.core_type<tc>} {
    %c0 = arith.constant 0 : index
    %c0_0 = arith.constant 0 : index
    %0 = vector.load %arg0[%c0, %c0_0] : memref<16x4xf32, #tpu.memory_space<vmem>>, vector<16x4xf32>
    %1 = arith.truncf %0 : vector<16x4xf32> to vector<16x4xbf16>
    %c0_1 = arith.constant 0 : index
    %c0_2 = arith.constant 0 : index
    %2 = vector.load %arg1[%c0_1, %c0_2] : memref<4x16xf32, #tpu.memory_space<vmem>>, vector<4x16xf32>
    %3 = arith.truncf %2 : vector<4x16xf32> to vector<4x16xbf16>
    %cst = arith.constant dense<0.000000e+00> : vector<16x16xf32>
    %4 = tpu.matmul %1, %3, %cst {dimension_numbers = #tpu.dot_dimension_numbers<[1], [0], [0], [1], [0, 0, 1, 1], [], []>} : vector<16x4xbf16>, vector<4x16xbf16>, vector<16x16xf32> -> vector<16x16xf32>
    %c0_3 = arith.constant 0 : index
    %c0_4 = arith.constant 0 : index
    %5 = vector.load %arg2[%c0_3, %c0_4] : memref<1x16xf32, #tpu.memory_space<vmem>>, vector<1x16xf32>
    %6 = vector.broadcast %5 : vector<1x16xf32> to vector<16x16xf32>
    %7 = arith.addf %4, %6 : vector<16x16xf32>
    %c0_5 = arith.constant 0 : index
    %c0_6 = arith.constant 0 : index
    %8 = vector.load %arg5[%c0_5, %c0_6] : memref<16x16xf32, #tpu.memory_space<vmem>>, vector<16x16xf32>
    %9 = arith.truncf %8 : vector<16x16xf32> to vector<16x16xbf16>
    %c0_7 = arith.constant 0 : index
    %c0_8 = arith.constant 0 : index
    %10 = vector.load %arg8[%c0_7, %c0_8] : memref<1x2xf32, #tpu.memory_space<vmem>>, vector<1x2xf32>
    %c0_9 = arith.constant 0 : index
    %c0_10 = arith.constant 0 : index
    %11 = vector.load %arg9[%c0_9, %c0_10] : memref<1x16xf32, #tpu.memory_space<vmem>>, vector<1x16xf32>
    %12 = arith.truncf %7 : vector<16x16xf32> to vector<16x16xbf16>
    %cst_11 = arith.constant dense<0.000000e+00> : vector<16x16xf32>
    %13 = tpu.matmul %12, %9, %cst_11 {dimension_numbers = #tpu.dot_dimension_numbers<[1], [0], [0], [1], [0, 0, 1, 1], [], []>} : vector<16x16xbf16>, vector<16x16xbf16>, vector<16x16xf32> -> vector<16x16xf32>
    %14 = arith.truncf %13 : vector<16x16xf32> to vector<16x16xbf16>
    %c0_12 = arith.constant 0 : index
    %c0_13 = arith.constant 0 : index
    %15 = vector.load %arg6[%c0_12, %c0_13] : memref<16x2xf32, #tpu.memory_space<vmem>>, vector<16x2xf32>
    %16 = arith.truncf %15 : vector<16x2xf32> to vector<16x2xbf16>
    %cst_14 = arith.constant dense<0.000000e+00> : vector<16x2xf32>
    %17 = tpu.matmul %14, %16, %cst_14 {dimension_numbers = #tpu.dot_dimension_numbers<[1], [0], [0], [1], [0, 0, 1, 1], [], []>} : vector<16x16xbf16>, vector<16x2xbf16>, vector<16x2xf32> -> vector<16x2xf32>
    %c0_15 = arith.constant 0 : index
    %c0_16 = arith.constant 0 : index
    %18 = vector.load %arg7[%c0_15, %c0_16] : memref<2x16xf32, #tpu.memory_space<vmem>>, vector<2x16xf32>
    %19 = arith.truncf %18 : vector<2x16xf32> to vector<2x16xbf16>
    %cst_17 = arith.constant dense<0.000000e+00> : vector<2x16xf32>
    %20 = tpu.matmul %19, %14, %cst_17 {dimension_numbers = #tpu.dot_dimension_numbers<[1], [1], [0], [0], [0, 0, 1, 0], [], []>} : vector<2x16xbf16>, vector<16x16xbf16>, vector<2x16xf32> -> vector<2x16xf32>
    %c0_18 = arith.constant 0 : index
    %c0_19 = arith.constant 0 : index
    %21 = vector.load %arg3[%c0_18, %c0_19] : memref<16x16xbf16, #tpu.memory_space<vmem>>, vector<16x16xbf16>
    %22 = arith.extf %21 : vector<16x16xbf16> to vector<16x16xf32>
    %c0_20 = arith.constant 0 : index
    %c0_21 = arith.constant 0 : index
    %23 = vector.load %arg4[%c0_20, %c0_21] : memref<16x16xbf16, #tpu.memory_space<vmem>>, vector<16x16xbf16>
    %24 = arith.extf %23 : vector<16x16xbf16> to vector<16x16xf32>
    %25 = vector.extract_strided_slice %17 {offsets = [0, 0], sizes = [16, 1], strides = [1, 1]} : vector<16x2xf32> to vector<16x1xf32>
    %26 = vector.extract_strided_slice %20 {offsets = [0, 0], sizes = [1, 16], strides = [1, 1]} : vector<2x16xf32> to vector<1x16xf32>
    %27 = vector.broadcast %25 : vector<16x1xf32> to vector<16x16xf32>
    %28 = vector.broadcast %26 : vector<1x16xf32> to vector<16x16xf32>
    %29 = arith.addf %27, %28 : vector<16x16xf32>
    %30 = vector.extract_strided_slice %10 {offsets = [0, 0], sizes = [1, 1], strides = [1, 1]} : vector<1x2xf32> to vector<1x1xf32>
    %31 = vector.extract %30[0, 0] : f32 from vector<1x1xf32>
    %32 = vector.broadcast %31 : f32 to vector<16x16xf32>
    %33 = arith.mulf %32, %24 : vector<16x16xf32>
    %34 = arith.addf %29, %33 : vector<16x16xf32>
    %cst_22 = arith.constant 2.000000e-01 : f32
    %35 = vector.broadcast %cst_22 : f32 to vector<16x16xf32>
    %36 = arith.mulf %35, %34 : vector<16x16xf32>
    %37 = arith.maximumf %34, %36 : vector<16x16xf32>
    %38 = arith.addf %37, %22 : vector<16x16xf32>
    %cst_23 = arith.constant dense<0xFF800000> : vector<16xf32>
    %39 = vector.multi_reduction <maximumf>, %38, %cst_23 [1] : vector<16x16xf32> to vector<16xf32>
    %40 = vector.shape_cast %39 : vector<16xf32> to vector<16x1xf32>
    %41 = vector.broadcast %40 : vector<16x1xf32> to vector<16x16xf32>
    %42 = arith.subf %38, %41 : vector<16x16xf32>
    %43 = math.exp %42 : vector<16x16xf32>
    %cst_24 = arith.constant dense<0.000000e+00> : vector<16xf32>
    %44 = vector.multi_reduction <add>, %43, %cst_24 [1] : vector<16x16xf32> to vector<16xf32>
    %45 = vector.shape_cast %44 : vector<16xf32> to vector<16x1xf32>
    %cst_25 = arith.constant 9.99999968E-21 : f32
    %46 = vector.broadcast %cst_25 : f32 to vector<16x1xf32>
    %47 = arith.maximumf %45, %46 : vector<16x1xf32>
    %48 = tpu.reciprocal %47 {approx = true} : vector<16x1xf32> -> vector<16x1xf32>
    %49 = vector.broadcast %48 : vector<16x1xf32> to vector<16x16xf32>
    %50 = arith.mulf %43, %49 : vector<16x16xf32>
    %51 = arith.truncf %50 : vector<16x16xf32> to vector<16x16xbf16>
    %52 = vector.extract_strided_slice %14 {offsets = [0, 0], sizes = [16, 8], strides = [1, 1]} : vector<16x16xbf16> to vector<16x8xbf16>
    %cst_26 = arith.constant dense<0.000000e+00> : vector<16x8xf32>
    %53 = tpu.matmul %51, %52, %cst_26 {dimension_numbers = #tpu.dot_dimension_numbers<[1], [0], [0], [1], [0, 0, 1, 1], [], []>} : vector<16x16xbf16>, vector<16x8xbf16>, vector<16x8xf32> -> vector<16x8xf32>
    %54 = vector.extract_strided_slice %17 {offsets = [0, 1], sizes = [16, 1], strides = [1, 1]} : vector<16x2xf32> to vector<16x1xf32>
    %55 = vector.extract_strided_slice %20 {offsets = [1, 0], sizes = [1, 16], strides = [1, 1]} : vector<2x16xf32> to vector<1x16xf32>
    %56 = vector.broadcast %54 : vector<16x1xf32> to vector<16x16xf32>
    %57 = vector.broadcast %55 : vector<1x16xf32> to vector<16x16xf32>
    %58 = arith.addf %56, %57 : vector<16x16xf32>
    %59 = vector.extract_strided_slice %10 {offsets = [0, 1], sizes = [1, 1], strides = [1, 1]} : vector<1x2xf32> to vector<1x1xf32>
    %60 = vector.extract %59[0, 0] : f32 from vector<1x1xf32>
    %61 = vector.broadcast %60 : f32 to vector<16x16xf32>
    %62 = arith.mulf %61, %24 : vector<16x16xf32>
    %63 = arith.addf %58, %62 : vector<16x16xf32>
    %cst_27 = arith.constant 2.000000e-01 : f32
    %64 = vector.broadcast %cst_27 : f32 to vector<16x16xf32>
    %65 = arith.mulf %64, %63 : vector<16x16xf32>
    %66 = arith.maximumf %63, %65 : vector<16x16xf32>
    %67 = arith.addf %66, %22 : vector<16x16xf32>
    %cst_28 = arith.constant dense<0xFF800000> : vector<16xf32>
    %68 = vector.multi_reduction <maximumf>, %67, %cst_28 [1] : vector<16x16xf32> to vector<16xf32>
    %69 = vector.shape_cast %68 : vector<16xf32> to vector<16x1xf32>
    %70 = vector.broadcast %69 : vector<16x1xf32> to vector<16x16xf32>
    %71 = arith.subf %67, %70 : vector<16x16xf32>
    %72 = math.exp %71 : vector<16x16xf32>
    %cst_29 = arith.constant dense<0.000000e+00> : vector<16xf32>
    %73 = vector.multi_reduction <add>, %72, %cst_29 [1] : vector<16x16xf32> to vector<16xf32>
    %74 = vector.shape_cast %73 : vector<16xf32> to vector<16x1xf32>
    %cst_30 = arith.constant 9.99999968E-21 : f32
    %75 = vector.broadcast %cst_30 : f32 to vector<16x1xf32>
    %76 = arith.maximumf %74, %75 : vector<16x1xf32>
    %77 = tpu.reciprocal %76 {approx = true} : vector<16x1xf32> -> vector<16x1xf32>
    %78 = vector.broadcast %77 : vector<16x1xf32> to vector<16x16xf32>
    %79 = arith.mulf %72, %78 : vector<16x16xf32>
    %80 = arith.truncf %79 : vector<16x16xf32> to vector<16x16xbf16>
    %81 = vector.extract_strided_slice %14 {offsets = [0, 8], sizes = [16, 8], strides = [1, 1]} : vector<16x16xbf16> to vector<16x8xbf16>
    %cst_31 = arith.constant dense<0.000000e+00> : vector<16x8xf32>
    %82 = tpu.matmul %80, %81, %cst_31 {dimension_numbers = #tpu.dot_dimension_numbers<[1], [0], [0], [1], [0, 0, 1, 1], [], []>} : vector<16x16xbf16>, vector<16x8xbf16>, vector<16x8xf32> -> vector<16x8xf32>
    %83 = tpu.concatenate %53, %82 in 1 : vector<16x8xf32>, vector<16x8xf32> -> vector<16x16xf32>
    %84 = vector.broadcast %11 : vector<1x16xf32> to vector<16x16xf32>
    %85 = arith.addf %83, %84 : vector<16x16xf32>
    %cst_32 = arith.constant 0.000000e+00 : f32
    %86 = vector.broadcast %cst_32 : f32 to vector<16x16xf32>
    %87 = arith.maximumf %85, %86 : vector<16x16xf32>
    %c0_33 = arith.constant 0 : index
    %c0_34 = arith.constant 0 : index
    %88 = vector.load %arg30[%c0_33, %c0_34] : memref<16x16xf32, #tpu.memory_space<vmem>>, vector<16x16xf32>
    tpu.vector_store %arg30[%c0_33, %c0_34], %87 {strides = array<i32>} : memref<16x16xf32, #tpu.memory_space<vmem>>, vector<16x16xf32>,
    %c0_35 = arith.constant 0 : index
    %c0_36 = arith.constant 0 : index
    %89 = vector.load %arg30[%c0_35, %c0_36] : memref<16x16xf32, #tpu.memory_space<vmem>>, vector<16x16xf32>
    %c0_37 = arith.constant 0 : index
    %c0_38 = arith.constant 0 : index
    %90 = vector.load %arg10[%c0_37, %c0_38] : memref<16x16xf32, #tpu.memory_space<vmem>>, vector<16x16xf32>
    %91 = arith.truncf %90 : vector<16x16xf32> to vector<16x16xbf16>
    %c0_39 = arith.constant 0 : index
    %c0_40 = arith.constant 0 : index
    %92 = vector.load %arg13[%c0_39, %c0_40] : memref<1x1xf32, #tpu.memory_space<vmem>>, vector<1x1xf32>
    %c0_41 = arith.constant 0 : index
    %c0_42 = arith.constant 0 : index
    %93 = vector.load %arg14[%c0_41, %c0_42] : memref<1x16xf32, #tpu.memory_space<vmem>>, vector<1x16xf32>
    %94 = arith.truncf %89 : vector<16x16xf32> to vector<16x16xbf16>
    %cst_43 = arith.constant dense<0.000000e+00> : vector<16x16xf32>
    %95 = tpu.matmul %94, %91, %cst_43 {dimension_numbers = #tpu.dot_dimension_numbers<[1], [0], [0], [1], [0, 0, 1, 1], [], []>} : vector<16x16xbf16>, vector<16x16xbf16>, vector<16x16xf32> -> vector<16x16xf32>
    %96 = arith.truncf %95 : vector<16x16xf32> to vector<16x16xbf16>
    %c0_44 = arith.constant 0 : index
    %c0_45 = arith.constant 0 : index
    %97 = vector.load %arg11[%c0_44, %c0_45] : memref<16x1xf32, #tpu.memory_space<vmem>>, vector<16x1xf32>
    %98 = arith.truncf %97 : vector<16x1xf32> to vector<16x1xbf16>
    %cst_46 = arith.constant dense<0.000000e+00> : vector<16x1xf32>
    %99 = tpu.matmul %96, %98, %cst_46 {dimension_numbers = #tpu.dot_dimension_numbers<[1], [0], [0], [1], [0, 0, 1, 1], [], []>} : vector<16x16xbf16>, vector<16x1xbf16>, vector<16x1xf32> -> vector<16x1xf32>
    %c0_47 = arith.constant 0 : index
    %c0_48 = arith.constant 0 : index
    %100 = vector.load %arg12[%c0_47, %c0_48] : memref<1x16xf32, #tpu.memory_space<vmem>>, vector<1x16xf32>
    %101 = arith.truncf %100 : vector<1x16xf32> to vector<1x16xbf16>
    %cst_49 = arith.constant dense<0.000000e+00> : vector<1x16xf32>
    %102 = tpu.matmul %101, %96, %cst_49 {dimension_numbers = #tpu.dot_dimension_numbers<[1], [1], [0], [0], [0, 0, 1, 0], [], []>} : vector<1x16xbf16>, vector<16x16xbf16>, vector<1x16xf32> -> vector<1x16xf32>
    %c0_50 = arith.constant 0 : index
    %c0_51 = arith.constant 0 : index
    %103 = vector.load %arg3[%c0_50, %c0_51] : memref<16x16xbf16, #tpu.memory_space<vmem>>, vector<16x16xbf16>
    %104 = arith.extf %103 : vector<16x16xbf16> to vector<16x16xf32>
    %c0_52 = arith.constant 0 : index
    %c0_53 = arith.constant 0 : index
    %105 = vector.load %arg4[%c0_52, %c0_53] : memref<16x16xbf16, #tpu.memory_space<vmem>>, vector<16x16xbf16>
    %106 = arith.extf %105 : vector<16x16xbf16> to vector<16x16xf32>
    %107 = vector.broadcast %99 : vector<16x1xf32> to vector<16x16xf32>
    %108 = vector.broadcast %102 : vector<1x16xf32> to vector<16x16xf32>
    %109 = arith.addf %107, %108 : vector<16x16xf32>
    %110 = vector.extract %92[0, 0] : f32 from vector<1x1xf32>
    %111 = vector.broadcast %110 : f32 to vector<16x16xf32>
    %112 = arith.mulf %111, %106 : vector<16x16xf32>
    %113 = arith.addf %109, %112 : vector<16x16xf32>
    %cst_54 = arith.constant 2.000000e-01 : f32
    %114 = vector.broadcast %cst_54 : f32 to vector<16x16xf32>
    %115 = arith.mulf %114, %113 : vector<16x16xf32>
    %116 = arith.maximumf %113, %115 : vector<16x16xf32>
    %117 = arith.addf %116, %104 : vector<16x16xf32>
    %cst_55 = arith.constant dense<0xFF800000> : vector<16xf32>
    %118 = vector.multi_reduction <maximumf>, %117, %cst_55 [1] : vector<16x16xf32> to vector<16xf32>
    %119 = vector.shape_cast %118 : vector<16xf32> to vector<16x1xf32>
    %120 = vector.broadcast %119 : vector<16x1xf32> to vector<16x16xf32>
    %121 = arith.subf %117, %120 : vector<16x16xf32>
    %122 = math.exp %121 : vector<16x16xf32>
    %cst_56 = arith.constant dense<0.000000e+00> : vector<16xf32>
    %123 = vector.multi_reduction <add>, %122, %cst_56 [1] : vector<16x16xf32> to vector<16xf32>
    %124 = vector.shape_cast %123 : vector<16xf32> to vector<16x1xf32>
    %cst_57 = arith.constant 9.99999968E-21 : f32
    %125 = vector.broadcast %cst_57 : f32 to vector<16x1xf32>
    %126 = arith.maximumf %124, %125 : vector<16x1xf32>
    %127 = tpu.reciprocal %126 {approx = true} : vector<16x1xf32> -> vector<16x1xf32>
    %128 = vector.broadcast %127 : vector<16x1xf32> to vector<16x16xf32>
    %129 = arith.mulf %122, %128 : vector<16x16xf32>
    %130 = arith.truncf %129 : vector<16x16xf32> to vector<16x16xbf16>
    %cst_58 = arith.constant dense<0.000000e+00> : vector<16x16xf32>
    %131 = tpu.matmul %130, %96, %cst_58 {dimension_numbers = #tpu.dot_dimension_numbers<[1], [0], [0], [1], [0, 0, 1, 1], [], []>} : vector<16x16xbf16>, vector<16x16xbf16>, vector<16x16xf32> -> vector<16x16xf32>
    %132 = vector.broadcast %93 : vector<1x16xf32> to vector<16x16xf32>
    %133 = arith.addf %131, %132 : vector<16x16xf32>
    %c0_59 = arith.constant 0 : index
    %c0_60 = arith.constant 0 : index
    %134 = vector.load %arg30[%c0_59, %c0_60] : memref<16x16xf32, #tpu.memory_space<vmem>>, vector<16x16xf32>
    tpu.vector_store %arg30[%c0_59, %c0_60], %133 {strides = array<i32>} : memref<16x16xf32, #tpu.memory_space<vmem>>, vector<16x16xf32>,
    %c0_61 = arith.constant 0 : index
    %c0_62 = arith.constant 0 : index
    %135 = vector.load %arg30[%c0_61, %c0_62] : memref<16x16xf32, #tpu.memory_space<vmem>>, vector<16x16xf32>
    %c0_63 = arith.constant 0 : index
    %c0_64 = arith.constant 0 : index
    %136 = vector.load %arg15[%c0_63, %c0_64] : memref<2x16xf32, #tpu.memory_space<vmem>>, vector<2x16xf32>
    %cst_65 = arith.constant dense<0.000000e+00> : vector<2x16xf32>
    %137 = tpu.matmul %136, %135, %cst_65 {dimension_numbers = #tpu.dot_dimension_numbers<[1], [0], [0], [1], [0, 0, 1, 1], [], []>} : vector<2x16xf32>, vector<16x16xf32>, vector<2x16xf32> -> vector<2x16xf32>
    %c0_66 = arith.constant 0 : index
    %c0_67 = arith.constant 0 : index
    %138 = vector.load %arg16[%c0_66, %c0_67] : memref<2x1xf32, #tpu.memory_space<vmem>>, vector<2x1xf32>
    %c0_68 = arith.constant 0 : index
    %c0_69 = arith.constant 0 : index
    %139 = vector.load %arg17[%c0_68, %c0_69] : memref<1x16xf32, #tpu.memory_space<vmem>>, vector<1x16xf32>
    %cst_70 = arith.constant dense<0.000000e+00> : vector<2x16xf32>
    %140 = tpu.matmul %138, %139, %cst_70 {dimension_numbers = #tpu.dot_dimension_numbers<[1], [0], [0], [1], [0, 0, 1, 1], [], []>} : vector<2x1xf32>, vector<1x16xf32>, vector<2x16xf32> -> vector<2x16xf32>
    %c0_71 = arith.constant 0 : index
    %c0_72 = arith.constant 0 : index
    %141 = vector.load %arg18[%c0_71, %c0_72] : memref<1x16xf32, #tpu.memory_space<vmem>>, vector<1x16xf32>
    %142 = vector.broadcast %141 : vector<1x16xf32> to vector<2x16xf32>
    %143 = arith.addf %140, %142 : vector<2x16xf32>
    %c0_73 = arith.constant 0 : index
    %c0_74 = arith.constant 0 : index
    %144 = vector.load %arg19[%c0_73, %c0_74] : memref<2x2xf32, #tpu.memory_space<vmem>>, vector<2x2xf32>
    %c0_75 = arith.constant 0 : index
    %c0_76 = arith.constant 0 : index
    %145 = vector.load %arg20[%c0_75, %c0_76] : memref<2x16xf32, #tpu.memory_space<vmem>>, vector<2x16xf32>
    %cst_77 = arith.constant dense<0.000000e+00> : vector<2x16xf32>
    %146 = tpu.matmul %144, %145, %cst_77 {dimension_numbers = #tpu.dot_dimension_numbers<[1], [0], [0], [1], [0, 0, 1, 1], [], []>} : vector<2x2xf32>, vector<2x16xf32>, vector<2x16xf32> -> vector<2x16xf32>
    %c0_78 = arith.constant 0 : index
    %c0_79 = arith.constant 0 : index
    %147 = vector.load %arg21[%c0_78, %c0_79] : memref<16x4xf32, #tpu.memory_space<vmem>>, vector<16x4xf32>
    %cst_80 = arith.constant dense<0.000000e+00> : vector<2x4xf32>
    %148 = tpu.matmul %137, %147, %cst_80 {dimension_numbers = #tpu.dot_dimension_numbers<[1], [0], [0], [1], [0, 0, 1, 1], [], []>} : vector<2x16xf32>, vector<16x4xf32>, vector<2x4xf32> -> vector<2x4xf32>
    %c0_81 = arith.constant 0 : index
    %c0_82 = arith.constant 0 : index
    %149 = vector.load %arg22[%c0_81, %c0_82] : memref<16x4xf32, #tpu.memory_space<vmem>>, vector<16x4xf32>
    %cst_83 = arith.constant dense<0.000000e+00> : vector<2x4xf32>
    %150 = tpu.matmul %143, %149, %cst_83 {dimension_numbers = #tpu.dot_dimension_numbers<[1], [0], [0], [1], [0, 0, 1, 1], [], []>} : vector<2x16xf32>, vector<16x4xf32>, vector<2x4xf32> -> vector<2x4xf32>
    %151 = arith.addf %148, %150 : vector<2x4xf32>
    %c0_84 = arith.constant 0 : index
    %c0_85 = arith.constant 0 : index
    %152 = vector.load %arg23[%c0_84, %c0_85] : memref<16x4xf32, #tpu.memory_space<vmem>>, vector<16x4xf32>
    %cst_86 = arith.constant dense<0.000000e+00> : vector<2x4xf32>
    %153 = tpu.matmul %146, %152, %cst_86 {dimension_numbers = #tpu.dot_dimension_numbers<[1], [0], [0], [1], [0, 0, 1, 1], [], []>} : vector<2x16xf32>, vector<16x4xf32>, vector<2x4xf32> -> vector<2x4xf32>
    %154 = arith.addf %151, %153 : vector<2x4xf32>
    %c0_87 = arith.constant 0 : index
    %c0_88 = arith.constant 0 : index
    %155 = vector.load %arg24[%c0_87, %c0_88] : memref<1x4xf32, #tpu.memory_space<vmem>>, vector<1x4xf32>
    %156 = vector.broadcast %155 : vector<1x4xf32> to vector<2x4xf32>
    %157 = arith.addf %154, %156 : vector<2x4xf32>
    %cst_89 = arith.constant 0.000000e+00 : f32
    %158 = vector.broadcast %cst_89 : f32 to vector<2x4xf32>
    %159 = arith.maximumf %157, %158 : vector<2x4xf32>
    %c0_90 = arith.constant 0 : index
    %c0_91 = arith.constant 0 : index
    %160 = vector.load %arg25[%c0_90, %c0_91] : memref<4x2xf32, #tpu.memory_space<vmem>>, vector<4x2xf32>
    %cst_92 = arith.constant dense<0.000000e+00> : vector<2x2xf32>
    %161 = tpu.matmul %159, %160, %cst_92 {dimension_numbers = #tpu.dot_dimension_numbers<[1], [0], [0], [1], [0, 0, 1, 1], [], []>} : vector<2x4xf32>, vector<4x2xf32>, vector<2x2xf32> -> vector<2x2xf32>
    %c0_93 = arith.constant 0 : index
    %c0_94 = arith.constant 0 : index
    %162 = vector.load %arg26[%c0_93, %c0_94] : memref<1x2xf32, #tpu.memory_space<vmem>>, vector<1x2xf32>
    %163 = vector.broadcast %162 : vector<1x2xf32> to vector<2x2xf32>
    %164 = arith.addf %161, %163 : vector<2x2xf32>
    %cst_95 = arith.constant 0.000000e+00 : f32
    %165 = vector.broadcast %cst_95 : f32 to vector<2x2xf32>
    %166 = arith.maximumf %164, %165 : vector<2x2xf32>
    %c0_96 = arith.constant 0 : index
    %c0_97 = arith.constant 0 : index
    %167 = vector.load %arg27[%c0_96, %c0_97] : memref<2x3xf32, #tpu.memory_space<vmem>>, vector<2x3xf32>
    %cst_98 = arith.constant dense<0.000000e+00> : vector<2x3xf32>
    %168 = tpu.matmul %166, %167, %cst_98 {dimension_numbers = #tpu.dot_dimension_numbers<[1], [0], [0], [1], [0, 0, 1, 1], [], []>} : vector<2x2xf32>, vector<2x3xf32>, vector<2x3xf32> -> vector<2x3xf32>
    %c0_99 = arith.constant 0 : index
    %c0_100 = arith.constant 0 : index
    %169 = vector.load %arg28[%c0_99, %c0_100] : memref<1x3xf32, #tpu.memory_space<vmem>>, vector<1x3xf32>
    %170 = vector.broadcast %169 : vector<1x3xf32> to vector<2x3xf32>
    %171 = arith.addf %168, %170 : vector<2x3xf32>
    %c0_101 = arith.constant 0 : index
    %c0_102 = arith.constant 0 : index
    %172 = vector.load %arg29[%c0_101, %c0_102] : memref<2x3xf32, #tpu.memory_space<vmem>>, vector<2x3xf32>
    tpu.vector_store %arg29[%c0_101, %c0_102], %171 {strides = array<i32>} : memref<2x3xf32, #tpu.memory_space<vmem>>, vector<2x3xf32>,
    return
  }
}

</mosaic_0001>

<llo_original>
// kernel: tpu_custom_call.1
$region0: #{tpu_custom_call.1}
  #allocation0 [shape = 'u32[]', space=smem, size = 0x4, offset = 0x4, fixed_abs, tag = 'smem constant byte address 0x4 - core index']
  #allocation1 [shape = 'u32[144,128]{1,0:T(1,128)}', space=vmem, size = 0x12000, scoped, tag = 'internal scratch']
  #allocation2 [shape = 'f32[16,16]{1,0:T(8,128)}', space=vmem, size = 0x2000, scoped, tag = 'scratch operand']
  #allocation3 [shape = 'f32[1,1]{1,0:T(1,128)S(1)}', space=vmem, size = 0x200, scoped, tag = 'scoped memory for tpu_custom_call.1']
  %s0 = inlined_call_operand.smem [shape: u32[30], index: -1, kind: input, shape index: {}]
  %s1 = sld [smem:[%s0]]
  %s2 = scalar_lea.smem %s0, 1
  %s3 = sld [smem:[%s2]]
  %s4 = scalar_lea.smem %s0, 2
  %s5 = sld [smem:[%s4]]
  %s6 = scalar_lea.smem %s0, 3
  %s7 = sld [smem:[%s6]]
  %s8 = scalar_lea.smem %s0, 4
  %s9 = sld [smem:[%s8]]
  %s10 = scalar_lea.smem %s0, 5
  %s11 = sld [smem:[%s10]]
  %s12 = scalar_lea.smem %s0, 6
  %s13 = sld [smem:[%s12]]
  %s14 = scalar_lea.smem %s0, 7
  %s15 = sld [smem:[%s14]]
  %s16 = scalar_lea.smem %s0, 8
  %s17 = sld [smem:[%s16]]
  %s18 = scalar_lea.smem %s0, 9
  %s19 = sld [smem:[%s18]]
  %s20 = scalar_lea.smem %s0, 10
  %s21 = sld [smem:[%s20]]
  %s22 = scalar_lea.smem %s0, 11
  %s23 = sld [smem:[%s22]]
  %s24 = scalar_lea.smem %s0, 12
  %s25 = sld [smem:[%s24]]
  %s26 = scalar_lea.smem %s0, 13
  %s27 = sld [smem:[%s26]]
  %s28 = scalar_lea.smem %s0, 14
  %s29 = sld [smem:[%s28]]
  %s30 = scalar_lea.smem %s0, 15
  %s31 = sld [smem:[%s30]]
  %s32 = scalar_lea.smem %s0, 16
  %s33 = sld [smem:[%s32]]
  %s34 = scalar_lea.smem %s0, 17
  %s35 = sld [smem:[%s34]]
  %s36 = scalar_lea.smem %s0, 18
  %s37 = sld [smem:[%s36]]
  %s38 = scalar_lea.smem %s0, 19
  %s39 = sld [smem:[%s38]]
  %s40 = scalar_lea.smem %s0, 20
  %s41 = sld [smem:[%s40]]
  %s42 = scalar_lea.smem %s0, 21
  %s43 = sld [smem:[%s42]]
  %s44 = scalar_lea.smem %s0, 22
  %s45 = sld [smem:[%s44]]
  %s46 = scalar_lea.smem %s0, 23
  %s47 = sld [smem:[%s46]]
  %s48 = scalar_lea.smem %s0, 24
  %s49 = sld [smem:[%s48]]
  %s50 = scalar_lea.smem %s0, 25
  %s51 = sld [smem:[%s50]]
  %s52 = scalar_lea.smem %s0, 26
  %s53 = sld [smem:[%s52]]
  %s54 = scalar_lea.smem %s0, 27
  %s55 = sld [smem:[%s54]]
  %s56 = scalar_lea.smem %s0, 28
  %s57 = sld [smem:[%s56]]
  %s58 = scalar_lea.smem %s0, 29
  %s59 = sld [smem:[%s58]]
  %s60 = sld [smem:[#allocation0]]
  $region126: #{tpu_custom_call.1} parent=0
    _
  %s62 = ssub.s32 1, %s60
  %s63 = scalar_select 0, %s62, %s60
  %v64 = vstv %s27
  %65 = vst [vmem:[#allocation3] sm:$0x1] %v64
  $region1: #{tpu_custom_call.1} parent=0
    #allocation4 [shape = 'u8[1024]{0}', space=vmem, size = 0x400, scoped, tag = 'output window, operand 0, single buffered']
    #allocation5 [shape = 's32[1]{0}', space=sflag, size = 0x4, scoped, tag = 'scoped memory for tpu_custom_call.1']
    %66 = vsyncpa [#allocation5], 0
    // Predicated region
    $region2: #{tpu_custom_call.1} parent=1 // pred_check
      _
    $region3: #{tpu_custom_call.1} parent=1 // pred_check_branch
      %68 = sbr.rel (0) target = $region5
    $region4: #{tpu_custom_call.1} parent=1 // pred_region
      _
    $region5: #{tpu_custom_call.1} parent=1 // pred_fallthru
      _
    // Predicated region
    $region6: #{tpu_custom_call.1} parent=1 // pred_check
      _
    $region7: #{tpu_custom_call.1} parent=1 // pred_check_branch
      %70 = sbr.rel (0) target = $region9
    $region8: #{tpu_custom_call.1} parent=1 // pred_region
      _
    $region9: #{tpu_custom_call.1} parent=1 // pred_fallthru
      _
    // Predicated region
    $region10: #{tpu_custom_call.1} parent=1 // pred_check
      _
    $region11: #{tpu_custom_call.1} parent=1 // pred_check_branch
      %72 = sbr.rel (0) target = $region13
    $region12: #{tpu_custom_call.1} parent=1 // pred_region
      _
    $region13: #{tpu_custom_call.1} parent=1 // pred_fallthru
      _
    // Predicated region
    $region14: #{tpu_custom_call.1} parent=1 // pred_check
      _
    $region15: #{tpu_custom_call.1} parent=1 // pred_check_branch
      %74 = sbr.rel (0) target = $region17
    $region16: #{tpu_custom_call.1} parent=1 // pred_region
      _
    $region17: #{tpu_custom_call.1} parent=1 // pred_fallthru
      _
    // Predicated region
    $region18: #{tpu_custom_call.1} parent=1 // pred_check
      _
    $region19: #{tpu_custom_call.1} parent=1 // pred_check_branch
      %76 = sbr.rel (0) target = $region21
    $region20: #{tpu_custom_call.1} parent=1 // pred_region
      _
    $region21: #{tpu_custom_call.1} parent=1 // pred_fallthru
      _
    // Predicated region
    $region22: #{tpu_custom_call.1} parent=1 // pred_check
      _
    $region23: #{tpu_custom_call.1} parent=1 // pred_check_branch
      %78 = sbr.rel (0) target = $region25
    $region24: #{tpu_custom_call.1} parent=1 // pred_region
      _
    $region25: #{tpu_custom_call.1} parent=1 // pred_fallthru
      _
    // Predicated region
    $region26: #{tpu_custom_call.1} parent=1 // pred_check
      _
    $region27: #{tpu_custom_call.1} parent=1 // pred_check_branch
      %80 = sbr.rel (0) target = $region29
    $region28: #{tpu_custom_call.1} parent=1 // pred_region
      _
    $region29: #{tpu_custom_call.1} parent=1 // pred_fallthru
      _
    // Predicated region
    $region30: #{tpu_custom_call.1} parent=1 // pred_check
      _
    $region31: #{tpu_custom_call.1} parent=1 // pred_check_branch
      %82 = sbr.rel (0) target = $region33
    $region32: #{tpu_custom_call.1} parent=1 // pred_region
      _
    $region33: #{tpu_custom_call.1} parent=1 // pred_fallthru
      _
    // Predicated region
    $region34: #{tpu_custom_call.1} parent=1 // pred_check
      _
    $region35: #{tpu_custom_call.1} parent=1 // pred_check_branch
      %84 = sbr.rel (0) target = $region37
    $region36: #{tpu_custom_call.1} parent=1 // pred_region
      _
    $region37: #{tpu_custom_call.1} parent=1 // pred_fallthru
      _
    // Predicated region
    $region38: #{tpu_custom_call.1} parent=1 // pred_check
      _
    $region39: #{tpu_custom_call.1} parent=1 // pred_check_branch
      %86 = sbr.rel (0) target = $region41
    $region40: #{tpu_custom_call.1} parent=1 // pred_region
      _
    $region41: #{tpu_custom_call.1} parent=1 // pred_fallthru
      _
    // Predicated region
    $region42: #{tpu_custom_call.1} parent=1 // pred_check
      _
    $region43: #{tpu_custom_call.1} parent=1 // pred_check_branch
      %88 = sbr.rel (0) target = $region45
    $region44: #{tpu_custom_call.1} parent=1 // pred_region
      _
    $region45: #{tpu_custom_call.1} parent=1 // pred_fallthru
      _
    // Predicated region
    $region46: #{tpu_custom_call.1} parent=1 // pred_check
      _
    $region47: #{tpu_custom_call.1} parent=1 // pred_check_branch
      %90 = sbr.rel (0) target = $region49
    $region48: #{tpu_custom_call.1} parent=1 // pred_region
      _
    $region49: #{tpu_custom_call.1} parent=1 // pred_fallthru
      _
    // Predicated region
    $region50: #{tpu_custom_call.1} parent=1 // pred_check
      _
    $region51: #{tpu_custom_call.1} parent=1 // pred_check_branch
      %92 = sbr.rel (0) target = $region53
    $region52: #{tpu_custom_call.1} parent=1 // pred_region
      _
    $region53: #{tpu_custom_call.1} parent=1 // pred_fallthru
      _
    // Predicated region
    $region54: #{tpu_custom_call.1} parent=1 // pred_check
      _
    $region55: #{tpu_custom_call.1} parent=1 // pred_check_branch
      %94 = sbr.rel (0) target = $region57
    $region56: #{tpu_custom_call.1} parent=1 // pred_region
      _
    $region57: #{tpu_custom_call.1} parent=1 // pred_fallthru
      _
    // Predicated region
    $region58: #{tpu_custom_call.1} parent=1 // pred_check
      _
    $region59: #{tpu_custom_call.1} parent=1 // pred_check_branch
      %96 = sbr.rel (0) target = $region61
    $region60: #{tpu_custom_call.1} parent=1 // pred_region
      _
    $region61: #{tpu_custom_call.1} parent=1 // pred_fallthru
      _
    // Predicated region
    $region62: #{tpu_custom_call.1} parent=1 // pred_check
      _
    $region63: #{tpu_custom_call.1} parent=1 // pred_check_branch
      %98 = sbr.rel (0) target = $region65
    $region64: #{tpu_custom_call.1} parent=1 // pred_region
      _
    $region65: #{tpu_custom_call.1} parent=1 // pred_fallthru
      _
    // Predicated region
    $region66: #{tpu_custom_call.1} parent=1 // pred_check
      _
    $region67: #{tpu_custom_call.1} parent=1 // pred_check_branch
      %100 = sbr.rel (0) target = $region69
    $region68: #{tpu_custom_call.1} parent=1 // pred_region
      _
    $region69: #{tpu_custom_call.1} parent=1 // pred_fallthru
      _
    // Predicated region
    $region70: #{tpu_custom_call.1} parent=1 // pred_check
      _
    $region71: #{tpu_custom_call.1} parent=1 // pred_check_branch
      %102 = sbr.rel (0) target = $region73
    $region72: #{tpu_custom_call.1} parent=1 // pred_region
      _
    $region73: #{tpu_custom_call.1} parent=1 // pred_fallthru
      _
    // Predicated region
    $region74: #{tpu_custom_call.1} parent=1 // pred_check
      _
    $region75: #{tpu_custom_call.1} parent=1 // pred_check_branch
      %104 = sbr.rel (0) target = $region77
    $region76: #{tpu_custom_call.1} parent=1 // pred_region
      _
    $region77: #{tpu_custom_call.1} parent=1 // pred_fallthru
      _
    // Predicated region
    $region78: #{tpu_custom_call.1} parent=1 // pred_check
      _
    $region79: #{tpu_custom_call.1} parent=1 // pred_check_branch
      %106 = sbr.rel (0) target = $region81
    $region80: #{tpu_custom_call.1} parent=1 // pred_region
      _
    $region81: #{tpu_custom_call.1} parent=1 // pred_fallthru
      _
    // Predicated region
    $region82: #{tpu_custom_call.1} parent=1 // pred_check
      _
    $region83: #{tpu_custom_call.1} parent=1 // pred_check_branch
      %108 = sbr.rel (0) target = $region85
    $region84: #{tpu_custom_call.1} parent=1 // pred_region
      _
    $region85: #{tpu_custom_call.1} parent=1 // pred_fallthru
      _
    // Predicated region
    $region86: #{tpu_custom_call.1} parent=1 // pred_check
      _
    $region87: #{tpu_custom_call.1} parent=1 // pred_check_branch
      %110 = sbr.rel (0) target = $region89
    $region88: #{tpu_custom_call.1} parent=1 // pred_region
      _
    $region89: #{tpu_custom_call.1} parent=1 // pred_fallthru
      _
    // Predicated region
    $region90: #{tpu_custom_call.1} parent=1 // pred_check
      _
    $region91: #{tpu_custom_call.1} parent=1 // pred_check_branch
      %112 = sbr.rel (0) target = $region93
    $region92: #{tpu_custom_call.1} parent=1 // pred_region
      _
    $region93: #{tpu_custom_call.1} parent=1 // pred_fallthru
      _
    // Predicated region
    $region94: #{tpu_custom_call.1} parent=1 // pred_check
      _
    $region95: #{tpu_custom_call.1} parent=1 // pred_check_branch
      %114 = sbr.rel (0) target = $region97
    $region96: #{tpu_custom_call.1} parent=1 // pred_region
      _
    $region97: #{tpu_custom_call.1} parent=1 // pred_fallthru
      _
    // Predicated region
    $region98: #{tpu_custom_call.1} parent=1 // pred_check
      _
    $region99: #{tpu_custom_call.1} parent=1 // pred_check_branch
      %116 = sbr.rel (0) target = $region101
    $region100: #{tpu_custom_call.1} parent=1 // pred_region
      _
    $region101: #{tpu_custom_call.1} parent=1 // pred_fallthru
      _
    // Predicated region
    $region102: #{tpu_custom_call.1} parent=1 // pred_check
      _
    $region103: #{tpu_custom_call.1} parent=1 // pred_check_branch
      %118 = sbr.rel (0) target = $region105
    $region104: #{tpu_custom_call.1} parent=1 // pred_region
      _
    $region105: #{tpu_custom_call.1} parent=1 // pred_fallthru
      _
    // Predicated region
    $region106: #{tpu_custom_call.1} parent=1 // pred_check
      _
    $region107: #{tpu_custom_call.1} parent=1 // pred_check_branch
      %120 = sbr.rel (0) target = $region109
    $region108: #{tpu_custom_call.1} parent=1 // pred_region
      _
    $region109: #{tpu_custom_call.1} parent=1 // pred_fallthru
      _
    // Predicated region
    $region110: #{tpu_custom_call.1} parent=1 // pred_check
      _
    $region111: #{tpu_custom_call.1} parent=1 // pred_check_branch
      %122 = sbr.rel (0) target = $region113
    $region112: #{tpu_custom_call.1} parent=1 // pred_region
      _
    $region113: #{tpu_custom_call.1} parent=1 // pred_fallthru
      _
    // Predicated region
    $region114: #{tpu_custom_call.1} parent=1 // pred_check
      _
    $region115: #{tpu_custom_call.1} parent=1 // pred_check_branch
      %124 = sbr.rel (0) target = $region117
    $region116: #{tpu_custom_call.1} parent=1 // pred_region
      _
    $region117: #{tpu_custom_call.1} parent=1 // pred_fallthru
      _
    %v126 = vld [vmem:[%s1] sm:$0xff]
    %v127 = vld [vmem:[%s1 + $0x8] sm:$0xff]
    %v128 = vpack.c.bf16 %v127, %v126
    %v129 = vld [vmem:[%s3] sm:$0xf]
    %v130 = vpack.c.bf16 %v129, %v129
    %v131 = vld [vmem:[%s5] sm:$0x1]
    %v133 = vlaneseq
    %v134 = vshrl.u32 %v133, 7
    %v135 = vsub.s32 0, %v134
    %v136 = vrot.slane %v131, %v135
    %vm138 = vcmask 31744
    %v140 = vsel %vm138, %v128, 0
    %vm142 = vcmask 1041408
    %v144 = vsel %vm142, %v130, 0
    %146 = vmatprep.subr.bf16.mxu0 0
    %147 = vmatpush1.bf16.msra.mxu0 0
    %148 = vmatprep.subr.bf16.mxu0 0
    %149 = vmatpush1.bf16.msra.mxu0 0
    %150 = vmatprep.subr.bf16.mxu0 0
    %151 = vmatpush1.bf16.msra.mxu0 0
    %152 = vmatprep.subr.bf16.mxu0 0
    %153 = vmatpush1.bf16.msra.mxu0 0
    %154 = vmatprep.subr.bf16.mxu0 0
    %155 = vmatpush1.bf16.msra.mxu0 0
    %156 = vmatprep.subr.bf16.mxu0 0
    %157 = vmatpush1.bf16.msra.mxu0 0
    %158 = vmatprep.subr.bf16.mxu0 0
    %159 = vmatpush1.bf16.msra.mxu0 0
    %160 = vmatprep.subr.bf16.mxu0 0
    %161 = vmatpush1.bf16.msra.mxu0 %v144
    %162 = vmatprep.subr.bf16.mxu0 0
    %163 = vmatpush2.bf16.msra.mxu0 0
    %164 = vmatprep.subr.bf16.mxu0 0
    %165 = vmatpush2.bf16.msra.mxu0 0
    %166 = vmatprep.subr.bf16.mxu0 0
    %167 = vmatpush2.bf16.msra.mxu0 0
    %168 = vmatprep.subr.bf16.mxu0 0
    %169 = vmatpush2.bf16.msra.mxu0 0
    %170 = vmatprep.subr.bf16.mxu0 0
    %171 = vmatpush2.bf16.msra.mxu0 0
    %172 = vmatprep.subr.bf16.mxu0 0
    %173 = vmatpush2.bf16.msra.mxu0 0
    %174 = vmatprep.subr.bf16.mxu0 0
    %175 = vmatpush2.bf16.msra.mxu0 0
    %176 = vmatprep.subr.bf16.mxu0 0
    %177 = vmatpush2.bf16.msra.mxu0 0
    %178 = vmatprep.mubr.bf16.mxu0 0
    %179 = vmatmul.mubr.bf16.gmra.mxu0 %v140
    %v180 = vpop.f32.mrf.mxu0
    %v181 = vadd.f32 %v136, %v180
    %v182 = vpop.f32.mrf.mxu0
    %v183 = vpop.f32.mrf.mxu0
    %v184 = vadd.f32 %v136, %v183
    %v185 = vpop.f32.mrf.mxu0
    %186 = vdwg.mxu0
    %v187 = vld [vmem:[%s11] sm:$0xff]
    %v188 = vld [vmem:[%s11 + $0x8] sm:$0xff]
    %v189 = vpack.c.bf16 %v188, %v187
    %v190 = vld [vmem:[%s17] sm:$0x1]
    %v191 = vld [vmem:[%s19] sm:$0x1]
    %v192 = vpack.c.bf16 %v184, %v181
    %vm193 = vcmask 130048
    %v195 = vsel %vm193, %v192, 0
    %197 = vmatprep.subr.bf16.mxu0 0
    %198 = vmatpush1.bf16.msra.mxu0 0
    %199 = vmatprep.subr.bf16.mxu0 0
    %200 = vmatpush1.bf16.msra.mxu0 0
    %201 = vmatprep.subr.bf16.mxu0 0
    %202 = vmatpush1.bf16.msra.mxu0 0
    %203 = vmatprep.subr.bf16.mxu0 0
    %204 = vmatpush1.bf16.msra.mxu0 0
    %205 = vmatprep.subr.bf16.mxu0 0
    %206 = vmatpush1.bf16.msra.mxu0 0
    %207 = vmatprep.subr.bf16.mxu0 0
    %208 = vmatpush1.bf16.msra.mxu0 0
    %209 = vmatprep.subr.bf16.mxu0 0
    %210 = vmatpush1.bf16.msra.mxu0 0
    %211 = vmatprep.subr.bf16.mxu0 0
    %212 = vmatpush1.bf16.msra.mxu0 %v189
    %213 = vmatprep.subr.bf16.mxu0 0
    %214 = vmatpush2.bf16.msra.mxu0 0
    %215 = vmatprep.subr.bf16.mxu0 0
    %216 = vmatpush2.bf16.msra.mxu0 0
    %217 = vmatprep.subr.bf16.mxu0 0
    %218 = vmatpush2.bf16.msra.mxu0 0
    %219 = vmatprep.subr.bf16.mxu0 0
    %220 = vmatpush2.bf16.msra.mxu0 0
    %221 = vmatprep.subr.bf16.mxu0 0
    %222 = vmatpush2.bf16.msra.mxu0 0
    %223 = vmatprep.subr.bf16.mxu0 0
    %224 = vmatpush2.bf16.msra.mxu0 0
    %225 = vmatprep.subr.bf16.mxu0 0
    %226 = vmatpush2.bf16.msra.mxu0 0
    %227 = vmatprep.subr.bf16.mxu0 0
    %228 = vmatpush2.bf16.msra.mxu0 0
    %229 = vmatprep.mubr.bf16.mxu0 0
    %230 = vmatmul.mubr.bf16.gmra.mxu0 %v195
    %v231 = vpop.f32.mrf.mxu0
    %v232 = vadd.f32 0.0, %v231
    %v233 = vpop.f32.mrf.mxu0
    %v234 = vpop.f32.mrf.mxu0
    %v235 = vadd.f32 0.0, %v234
    %v236 = vpop.f32.mrf.mxu0
    %237 = vdwg.mxu0
    %v238 = vpack.c.bf16 %v235, %v232
    %v239 = vld [vmem:[%s13] sm:$0xff]
    %v240 = vld [vmem:[%s13 + $0x8] sm:$0xff]
    %v241 = vpack.c.bf16 %v240, %v239
    %v243 = vsel %vm193, %v238, 0
    %245 = vmatprep.subr.bf16.mxu0 0
    %246 = vmatpush1.bf16.msra.mxu0 0
    %247 = vmatprep.subr.bf16.mxu0 0
    %248 = vmatpush1.bf16.msra.mxu0 0
    %249 = vmatprep.subr.bf16.mxu0 0
    %250 = vmatpush1.bf16.msra.mxu0 0
    %251 = vmatprep.subr.bf16.mxu0 0
    %252 = vmatpush1.bf16.msra.mxu0 0
    %253 = vmatprep.subr.bf16.mxu0 0
    %254 = vmatpush1.bf16.msra.mxu0 0
    %255 = vmatprep.subr.bf16.mxu0 0
    %256 = vmatpush1.bf16.msra.mxu0 0
    %257 = vmatprep.subr.bf16.mxu0 0
    %258 = vmatpush1.bf16.msra.mxu0 0
    %259 = vmatprep.subr.bf16.mxu0 0
    %260 = vmatpush1.bf16.msra.mxu0 %v241
    %261 = vmatprep.subr.bf16.mxu0 0
    %262 = vmatpush2.bf16.msra.mxu0 0
    %263 = vmatprep.subr.bf16.mxu0 0
    %264 = vmatpush2.bf16.msra.mxu0 0
    %265 = vmatprep.subr.bf16.mxu0 0
    %266 = vmatpush2.bf16.msra.mxu0 0
    %267 = vmatprep.subr.bf16.mxu0 0
    %268 = vmatpush2.bf16.msra.mxu0 0
    %269 = vmatprep.subr.bf16.mxu0 0
    %270 = vmatpush2.bf16.msra.mxu0 0
    %271 = vmatprep.subr.bf16.mxu0 0
    %272 = vmatpush2.bf16.msra.mxu0 0
    %273 = vmatprep.subr.bf16.mxu0 0
    %274 = vmatpush2.bf16.msra.mxu0 0
    %275 = vmatprep.subr.bf16.mxu0 0
    %276 = vmatpush2.bf16.msra.mxu0 0
    %277 = vmatprep.mubr.bf16.mxu0 0
    %278 = vmatmul.mubr.bf16.gmra.mxu0 %v243
    %v279 = vpop.f32.mrf.mxu0
    %v280 = vadd.f32 0.0, %v279
    %v281 = vpop.f32.mrf.mxu0
    %v282 = vpop.f32.mrf.mxu0
    %v283 = vadd.f32 0.0, %v282
    %v284 = vpop.f32.mrf.mxu0
    %285 = vdwg.mxu0
    %v286 = vld [vmem:[%s15] sm:$0x3]
    %v287 = vpack.c.bf16 %v286, %v286
    %v289 = vsel %vm193, %v287, 0
    %291 = vmatprep.subr.bf16.mxu0 0
    %292 = vmatpush1.bf16.xpose.msra.mxu0 0
    %293 = vmatprep.subr.bf16.mxu0 0
    %294 = vmatpush1.bf16.xpose.msra.mxu0 0
    %295 = vmatprep.subr.bf16.mxu0 0
    %296 = vmatpush1.bf16.xpose.msra.mxu0 0
    %297 = vmatprep.subr.bf16.mxu0 0
    %298 = vmatpush1.bf16.xpose.msra.mxu0 0
    %299 = vmatprep.subr.bf16.mxu0 0
    %300 = vmatpush1.bf16.xpose.msra.mxu0 0
    %301 = vmatprep.subr.bf16.mxu0 0
    %302 = vmatpush1.bf16.xpose.msra.mxu0 0
    %303 = vmatprep.subr.bf16.mxu0 0
    %304 = vmatpush1.bf16.xpose.msra.mxu0 0
    %305 = vmatprep.subr.bf16.mxu0 0
    %306 = vmatpush1.bf16.xpose.msra.mxu0 %v243
    %307 = vmatprep.subr.bf16.mxu0 0
    %308 = vmatpush2.bf16.xpose.msra.mxu0 0
    %309 = vmatprep.subr.bf16.mxu0 0
    %310 = vmatpush2.bf16.xpose.msra.mxu0 0
    %311 = vmatprep.subr.bf16.mxu0 0
    %312 = vmatpush2.bf16.xpose.msra.mxu0 0
    %313 = vmatprep.subr.bf16.mxu0 0
    %314 = vmatpush2.bf16.xpose.msra.mxu0 0
    %315 = vmatprep.subr.bf16.mxu0 0
    %316 = vmatpush2.bf16.xpose.msra.mxu0 0
    %317 = vmatprep.subr.bf16.mxu0 0
    %318 = vmatpush2.bf16.xpose.msra.mxu0 0
    %319 = vmatprep.subr.bf16.mxu0 0
    %320 = vmatpush2.bf16.xpose.msra.mxu0 0
    %321 = vmatprep.subr.bf16.mxu0 0
    %322 = vmatpush2.bf16.xpose.msra.mxu0 0
    %323 = vmatprep.mubr.bf16.mxu0 0
    %324 = vmatmul.mubr.bf16.gmra.mxu0 %v289
    %v325 = vpop.f32.mrf.mxu0
    %v326 = vadd.f32 0.0, %v325
    %v327 = vpop.f32.mrf.mxu0
    %v328 = vpop.f32.mrf.mxu0
    %v329 = vpop.f32.mrf.mxu0
    %330 = vdwg.mxu0
    %v331 = vld [vmem:[%s7] sm:$0xf]
    %v332 = vld [vmem:[%s7 + $0x4] sm:$0xf]
    %v333 = vunpack.c.l.bf16 %v331
    %v334 = vunpack.c.l.bf16 %v332
    %v335 = vld [vmem:[%s9] sm:$0xf]
    %v336 = vld [vmem:[%s9 + $0x4] sm:$0xf]
    %v337 = vunpack.c.l.bf16 %v335
    %v338 = vunpack.c.l.bf16 %v336
    %340 = vset.pattern.permute.xlu0 0
    %341 = vperm.xlu0 %340, %v280
    %v342 = vpop.permute.xlu0 %341
    %345 = vset.pattern.permute.xlu0 0
    %346 = vperm.xlu0 %345, %v283
    %v347 = vpop.permute.xlu0 %346
    %v349 = vlaneseq
    %v350 = vshrl.u32 %v349, 7
    %v351 = vsub.s32 0, %v350
    %v352 = vrot.slane %v326, %v351
    %v353 = vadd.f32 %v342, %v352
    %v354 = vadd.f32 %v347, %v352
    %s355 = vtos %v190
    %v356 = vstv %s355
    %v357 = vmul.f32 %v356, %v337
    %v358 = vmul.f32 %v356, %v338
    %v359 = vadd.f32 %v353, %v357
    %v360 = vadd.f32 %v354, %v358
    %v361 = vmul.f32 %v359, 0.2
    %v362 = vmul.f32 %v360, 0.2
    %v363 = vmax.f32 %v359, %v361
    %v364 = vmax.f32 %v360, %v362
    %v365 = vadd.f32 %v363, %v333
    %v366 = vadd.f32 %v364, %v334
    %v367 = vsel %vm193, %v365, -inf
    %368 = vmax.xlane.f32.xlu0 %v367
    %v369 = vpop.xlane.xlu0 %368
    %v370 = vsel %vm193, %v366, -inf
    %371 = vmax.xlane.f32.xlu0 %v370
    %v372 = vpop.xlane.xlu0 %371
    %v373 = vsub.f32 %v365, %v369
    %v374 = vsub.f32 %v366, %v372
    %v375 = vmul.f32 %v373, 1.442695
    %v376 = vpow.pop %v375
    %v377 = vmul.f32 %v374, 1.442695
    %v378 = vpow.pop %v377
    %v379 = vsel %vm193, %v376, 0.0
    %380 = vadd.xlane.f32.xlu0 %v379
    %v381 = vpop.xlane.xlu0 %380
    %v382 = vsel %vm193, %v378, 0.0
    %383 = vadd.xlane.f32.xlu0 %v382
    %v384 = vpop.xlane.xlu0 %383
    %v385 = vmax.f32 %v381, 1e-20
    %v386 = vmax.f32 %v384, 1e-20
    %v387 = vrcp.pop %v385
    %v388 = vrcp.pop %v386
    %v389 = vmul.f32 %v376, %v387
    %v390 = vmul.f32 %v378, %v388
    %v391 = vpack.c.bf16 %v390, %v389
    %v393 = vsel %vm193, %v391, 0
    %395 = vmatprep.subr.bf16.mxu0 0
    %396 = vmatpush1.bf16.msra.mxu0 0
    %397 = vmatprep.subr.bf16.mxu0 0
    %398 = vmatpush1.bf16.msra.mxu0 0
    %399 = vmatprep.subr.bf16.mxu0 0
    %400 = vmatpush1.bf16.msra.mxu0 0
    %401 = vmatprep.subr.bf16.mxu0 0
    %402 = vmatpush1.bf16.msra.mxu0 0
    %403 = vmatprep.subr.bf16.mxu0 0
    %404 = vmatpush1.bf16.msra.mxu0 0
    %405 = vmatprep.subr.bf16.mxu0 0
    %406 = vmatpush1.bf16.msra.mxu0 0
    %407 = vmatprep.subr.bf16.mxu0 0
    %408 = vmatpush1.bf16.msra.mxu0 0
    %409 = vmatprep.subr.bf16.mxu0 0
    %410 = vmatpush1.bf16.msra.mxu0 %v238
    %411 = vmatprep.subr.bf16.mxu0 0
    %412 = vmatpush2.bf16.msra.mxu0 0
    %413 = vmatprep.subr.bf16.mxu0 0
    %414 = vmatpush2.bf16.msra.mxu0 0
    %415 = vmatprep.subr.bf16.mxu0 0
    %416 = vmatpush2.bf16.msra.mxu0 0
    %417 = vmatprep.subr.bf16.mxu0 0
    %418 = vmatpush2.bf16.msra.mxu0 0
    %419 = vmatprep.subr.bf16.mxu0 0
    %420 = vmatpush2.bf16.msra.mxu0 0
    %421 = vmatprep.subr.bf16.mxu0 0
    %422 = vmatpush2.bf16.msra.mxu0 0
    %423 = vmatprep.subr.bf16.mxu0 0
    %424 = vmatpush2.bf16.msra.mxu0 0
    %425 = vmatprep.subr.bf16.mxu0 0
    %426 = vmatpush2.bf16.msra.mxu0 0
    %427 = vmatprep.mubr.bf16.mxu0 0
    %428 = vmatmul.mubr.bf16.gmra.mxu0 %v393
    %v429 = vpop.f32.mrf.mxu0
    %v430 = vadd.f32 0.0, %v429
    %v431 = vpop.f32.mrf.mxu0
    %v432 = vpop.f32.mrf.mxu0
    %v433 = vadd.f32 0.0, %v432
    %v434 = vpop.f32.mrf.mxu0
    %435 = vdwg.mxu0
    %436 = vset.pattern.permute.xlu0 1
    %437 = vperm.xlu0 %436, %v280
    %v438 = vpop.permute.xlu0 %437
    %440 = vset.pattern.permute.xlu0 1
    %441 = vperm.xlu0 %440, %v283
    %v442 = vpop.permute.xlu0 %441
    %v444 = vlaneseq
    %v445 = vshrl.u32 %v444, 7
    %v446 = vsub.s32 1, %v445
    %v447 = vrot.slane %v326, %v446
    %v448 = vadd.f32 %v438, %v447
    %v449 = vadd.f32 %v442, %v447
    %450 = vrot.lane.b32.xlu0 %v190, 127
    %v451 = vpop.permute.xlu0 %450
    %s452 = vtos %v451
    %v453 = vstv %s452
    %v454 = vmul.f32 %v453, %v337
    %v455 = vmul.f32 %v453, %v338
    %v456 = vadd.f32 %v448, %v454
    %v457 = vadd.f32 %v449, %v455
    %v458 = vmul.f32 %v456, 0.2
    %v459 = vmul.f32 %v457, 0.2
    %v460 = vmax.f32 %v456, %v458
    %v461 = vmax.f32 %v457, %v459
    %v462 = vadd.f32 %v460, %v333
    %v463 = vadd.f32 %v461, %v334
    %v464 = vsel %vm193, %v462, -inf
    %465 = vmax.xlane.f32.xlu0 %v464
    %v466 = vpop.xlane.xlu0 %465
    %v467 = vsel %vm193, %v463, -inf
    %468 = vmax.xlane.f32.xlu0 %v467
    %v469 = vpop.xlane.xlu0 %468
    %v470 = vsub.f32 %v462, %v466
    %v471 = vsub.f32 %v463, %v469
    %v472 = vmul.f32 %v470, 1.442695
    %v473 = vpow.pop %v472
    %v474 = vmul.f32 %v471, 1.442695
    %v475 = vpow.pop %v474
    %v476 = vsel %vm193, %v473, 0.0
    %477 = vadd.xlane.f32.xlu0 %v476
    %v478 = vpop.xlane.xlu0 %477
    %v479 = vsel %vm193, %v475, 0.0
    %480 = vadd.xlane.f32.xlu0 %v479
    %v481 = vpop.xlane.xlu0 %480
    %v482 = vmax.f32 %v478, 1e-20
    %v483 = vmax.f32 %v481, 1e-20
    %v484 = vrcp.pop %v482
    %v485 = vrcp.pop %v483
    %v486 = vmul.f32 %v473, %v484
    %v487 = vmul.f32 %v475, %v485
    %v488 = vpack.c.bf16 %v487, %v486
    %490 = vrot.lane.b32.xlu0 %v238, 120
    %v491 = vpop.permute.xlu0 %490
    %v494 = vsel %vm193, %v488, 0
    %496 = vmatprep.subr.bf16.mxu0 0
    %497 = vmatpush1.bf16.msra.mxu0 0
    %498 = vmatprep.subr.bf16.mxu0 0
    %499 = vmatpush1.bf16.msra.mxu0 0
    %500 = vmatprep.subr.bf16.mxu0 0
    %501 = vmatpush1.bf16.msra.mxu0 0
    %502 = vmatprep.subr.bf16.mxu0 0
    %503 = vmatpush1.bf16.msra.mxu0 0
    %504 = vmatprep.subr.bf16.mxu0 0
    %505 = vmatpush1.bf16.msra.mxu0 0
    %506 = vmatprep.subr.bf16.mxu0 0
    %507 = vmatpush1.bf16.msra.mxu0 0
    %508 = vmatprep.subr.bf16.mxu0 0
    %509 = vmatpush1.bf16.msra.mxu0 0
    %510 = vmatprep.subr.bf16.mxu0 0
    %511 = vmatpush1.bf16.msra.mxu0 %v491
    %512 = vmatprep.subr.bf16.mxu0 0
    %513 = vmatpush2.bf16.msra.mxu0 0
    %514 = vmatprep.subr.bf16.mxu0 0
    %515 = vmatpush2.bf16.msra.mxu0 0
    %516 = vmatprep.subr.bf16.mxu0 0
    %517 = vmatpush2.bf16.msra.mxu0 0
    %518 = vmatprep.subr.bf16.mxu0 0
    %519 = vmatpush2.bf16.msra.mxu0 0
    %520 = vmatprep.subr.bf16.mxu0 0
    %521 = vmatpush2.bf16.msra.mxu0 0
    %522 = vmatprep.subr.bf16.mxu0 0
    %523 = vmatpush2.bf16.msra.mxu0 0
    %524 = vmatprep.subr.bf16.mxu0 0
    %525 = vmatpush2.bf16.msra.mxu0 0
    %526 = vmatprep.subr.bf16.mxu0 0
    %527 = vmatpush2.bf16.msra.mxu0 0
    %528 = vmatprep.mubr.bf16.mxu0 0
    %529 = vmatmul.mubr.bf16.gmra.mxu0 %v494
    %v530 = vpop.f32.mrf.mxu0
    %v531 = vadd.f32 0.0, %v530
    %v532 = vpop.f32.mrf.mxu0
    %v533 = vpop.f32.mrf.mxu0
    %v534 = vadd.f32 0.0, %v533
    %v535 = vpop.f32.mrf.mxu0
    %536 = vdwg.mxu0
    %539 = vrot.lane.b32.xlu0 %v531, 8
    %v540 = vpop.permute.xlu0 %539
    %541 = vrot.lane.b32.xlu0 %v534, 8
    %v542 = vpop.permute.xlu0 %541
    %vm545 = vcmask 64512
    %v546 = vsel %vm545, %v430, %v540
    %v547 = vsel %vm545, %v433, %v542
    %v549 = vlaneseq
    %v550 = vshrl.u32 %v549, 7
    %v551 = vsub.s32 0, %v550
    %v552 = vrot.slane %v191, %v551
    %v554 = vadd.f32 %v546, %v552
    %v555 = vadd.f32 %v547, %v552
    %v556 = vmax.f32 %v554, 0.0
    %v557 = vmax.f32 %v555, 0.0
    %558 = vst.msk [vmem:[#allocation2] sm:$0xff] %vm193, %v556
    %559 = vst.msk [vmem:[#allocation2 + $0x8] sm:$0xff] %vm193, %v557
    %v560 = vld [vmem:[#allocation2] sm:$0xff]
    %v561 = vld [vmem:[#allocation2 + $0x8] sm:$0xff]
    %v562 = vld [vmem:[%s21] sm:$0xff]
    %v563 = vld [vmem:[%s21 + $0x8] sm:$0xff]
    %v564 = vpack.c.bf16 %v563, %v562
    %v565 = vld [vmem:[#allocation3] sm:$0x1]
    %v566 = vld [vmem:[%s29] sm:$0x1]
    %v567 = vpack.c.bf16 %v561, %v560
    %v569 = vsel %vm193, %v567, 0
    %571 = vmatprep.subr.bf16.mxu0 0
    %572 = vmatpush1.bf16.msra.mxu0 0
    %573 = vmatprep.subr.bf16.mxu0 0
    %574 = vmatpush1.bf16.msra.mxu0 0
    %575 = vmatprep.subr.bf16.mxu0 0
    %576 = vmatpush1.bf16.msra.mxu0 0
    %577 = vmatprep.subr.bf16.mxu0 0
    %578 = vmatpush1.bf16.msra.mxu0 0
    %579 = vmatprep.subr.bf16.mxu0 0
    %580 = vmatpush1.bf16.msra.mxu0 0
    %581 = vmatprep.subr.bf16.mxu0 0
    %582 = vmatpush1.bf16.msra.mxu0 0
    %583 = vmatprep.subr.bf16.mxu0 0
    %584 = vmatpush1.bf16.msra.mxu0 0
    %585 = vmatprep.subr.bf16.mxu0 0
    %586 = vmatpush1.bf16.msra.mxu0 %v564
    %587 = vmatprep.subr.bf16.mxu0 0
    %588 = vmatpush2.bf16.msra.mxu0 0
    %589 = vmatprep.subr.bf16.mxu0 0
    %590 = vmatpush2.bf16.msra.mxu0 0
    %591 = vmatprep.subr.bf16.mxu0 0
    %592 = vmatpush2.bf16.msra.mxu0 0
    %593 = vmatprep.subr.bf16.mxu0 0
    %594 = vmatpush2.bf16.msra.mxu0 0
    %595 = vmatprep.subr.bf16.mxu0 0
    %596 = vmatpush2.bf16.msra.mxu0 0
    %597 = vmatprep.subr.bf16.mxu0 0
    %598 = vmatpush2.bf16.msra.mxu0 0
    %599 = vmatprep.subr.bf16.mxu0 0
    %600 = vmatpush2.bf16.msra.mxu0 0
    %601 = vmatprep.subr.bf16.mxu0 0
    %602 = vmatpush2.bf16.msra.mxu0 0
    %603 = vmatprep.mubr.bf16.mxu0 0
    %604 = vmatmul.mubr.bf16.gmra.mxu0 %v569
    %v605 = vpop.f32.mrf.mxu0
    %v606 = vadd.f32 0.0, %v605
    %v607 = vpop.f32.mrf.mxu0
    %v608 = vpop.f32.mrf.mxu0
    %v609 = vadd.f32 0.0, %v608
    %v610 = vpop.f32.mrf.mxu0
    %611 = vdwg.mxu0
    %v612 = vpack.c.bf16 %v609, %v606
    %v613 = vld [vmem:[%s23] sm:$0xff]
    %v614 = vld [vmem:[%s23 + $0x8] sm:$0xff]
    %v615 = vpack.c.bf16 %v614, %v613
    %v617 = vsel %vm193, %v612, 0
    %619 = vmatprep.subr.bf16.mxu0 0
    %620 = vmatpush1.bf16.msra.mxu0 0
    %621 = vmatprep.subr.bf16.mxu0 0
    %622 = vmatpush1.bf16.msra.mxu0 0
    %623 = vmatprep.subr.bf16.mxu0 0
    %624 = vmatpush1.bf16.msra.mxu0 0
    %625 = vmatprep.subr.bf16.mxu0 0
    %626 = vmatpush1.bf16.msra.mxu0 0
    %627 = vmatprep.subr.bf16.mxu0 0
    %628 = vmatpush1.bf16.msra.mxu0 0
    %629 = vmatprep.subr.bf16.mxu0 0
    %630 = vmatpush1.bf16.msra.mxu0 0
    %631 = vmatprep.subr.bf16.mxu0 0
    %632 = vmatpush1.bf16.msra.mxu0 0
    %633 = vmatprep.subr.bf16.mxu0 0
    %634 = vmatpush1.bf16.msra.mxu0 %v615
    %635 = vmatprep.subr.bf16.mxu0 0
    %636 = vmatpush2.bf16.msra.mxu0 0
    %637 = vmatprep.subr.bf16.mxu0 0
    %638 = vmatpush2.bf16.msra.mxu0 0
    %639 = vmatprep.subr.bf16.mxu0 0
    %640 = vmatpush2.bf16.msra.mxu0 0
    %641 = vmatprep.subr.bf16.mxu0 0
    %642 = vmatpush2.bf16.msra.mxu0 0
    %643 = vmatprep.subr.bf16.mxu0 0
    %644 = vmatpush2.bf16.msra.mxu0 0
    %645 = vmatprep.subr.bf16.mxu0 0
    %646 = vmatpush2.bf16.msra.mxu0 0
    %647 = vmatprep.subr.bf16.mxu0 0
    %648 = vmatpush2.bf16.msra.mxu0 0
    %649 = vmatprep.subr.bf16.mxu0 0
    %650 = vmatpush2.bf16.msra.mxu0 0
    %651 = vmatprep.mubr.bf16.mxu0 0
    %652 = vmatmul.mubr.bf16.gmra.mxu0 %v617
    %v653 = vpop.f32.mrf.mxu0
    %v654 = vadd.f32 0.0, %v653
    %v655 = vpop.f32.mrf.mxu0
    %v656 = vpop.f32.mrf.mxu0
    %v657 = vadd.f32 0.0, %v656
    %v658 = vpop.f32.mrf.mxu0
    %659 = vdwg.mxu0
    %v660 = vld [vmem:[%s25] sm:$0x1]
    %v661 = vpack.c.bf16 %v660, %v660
    %v663 = vsel %vm193, %v661, 0
    %665 = vmatprep.subr.bf16.mxu0 0
    %666 = vmatpush1.bf16.xpose.msra.mxu0 0
    %667 = vmatprep.subr.bf16.mxu0 0
    %668 = vmatpush1.bf16.xpose.msra.mxu0 0
    %669 = vmatprep.subr.bf16.mxu0 0
    %670 = vmatpush1.bf16.xpose.msra.mxu0 0
    %671 = vmatprep.subr.bf16.mxu0 0
    %672 = vmatpush1.bf16.xpose.msra.mxu0 0
    %673 = vmatprep.subr.bf16.mxu0 0
    %674 = vmatpush1.bf16.xpose.msra.mxu0 0
    %675 = vmatprep.subr.bf16.mxu0 0
    %676 = vmatpush1.bf16.xpose.msra.mxu0 0
    %677 = vmatprep.subr.bf16.mxu0 0
    %678 = vmatpush1.bf16.xpose.msra.mxu0 0
    %679 = vmatprep.subr.bf16.mxu0 0
    %680 = vmatpush1.bf16.xpose.msra.mxu0 %v617
    %681 = vmatprep.subr.bf16.mxu0 0
    %682 = vmatpush2.bf16.xpose.msra.mxu0 0
    %683 = vmatprep.subr.bf16.mxu0 0
    %684 = vmatpush2.bf16.xpose.msra.mxu0 0
    %685 = vmatprep.subr.bf16.mxu0 0
    %686 = vmatpush2.bf16.xpose.msra.mxu0 0
    %687 = vmatprep.subr.bf16.mxu0 0
    %688 = vmatpush2.bf16.xpose.msra.mxu0 0
    %689 = vmatprep.subr.bf16.mxu0 0
    %690 = vmatpush2.bf16.xpose.msra.mxu0 0
    %691 = vmatprep.subr.bf16.mxu0 0
    %692 = vmatpush2.bf16.xpose.msra.mxu0 0
    %693 = vmatprep.subr.bf16.mxu0 0
    %694 = vmatpush2.bf16.xpose.msra.mxu0 0
    %695 = vmatprep.subr.bf16.mxu0 0
    %696 = vmatpush2.bf16.xpose.msra.mxu0 0
    %697 = vmatprep.mubr.bf16.mxu0 0
    %698 = vmatmul.mubr.bf16.gmra.mxu0 %v663
    %v699 = vpop.f32.mrf.mxu0
    %v700 = vadd.f32 0.0, %v699
    %v701 = vpop.f32.mrf.mxu0
    %v702 = vpop.f32.mrf.mxu0
    %v703 = vpop.f32.mrf.mxu0
    %704 = vdwg.mxu0
    %v705 = vld [vmem:[%s7] sm:$0xf]
    %v706 = vld [vmem:[%s7 + $0x4] sm:$0xf]
    %v707 = vunpack.c.l.bf16 %v705
    %v708 = vunpack.c.l.bf16 %v706
    %v709 = vld [vmem:[%s9] sm:$0xf]
    %v710 = vld [vmem:[%s9 + $0x4] sm:$0xf]
    %v711 = vunpack.c.l.bf16 %v709
    %v712 = vunpack.c.l.bf16 %v710
    %714 = vset.pattern.permute.xlu0 0
    %715 = vperm.xlu0 %714, %v654
    %v716 = vpop.permute.xlu0 %715
    %719 = vset.pattern.permute.xlu0 0
    %720 = vperm.xlu0 %719, %v657
    %v721 = vpop.permute.xlu0 %720
    %v723 = vlaneseq
    %v724 = vshrl.u32 %v723, 7
    %v725 = vsub.s32 0, %v724
    %v726 = vrot.slane %v700, %v725
    %v727 = vadd.f32 %v716, %v726
    %v728 = vadd.f32 %v721, %v726
    %s729 = vtos %v565
    %v730 = vstv %s729
    %v731 = vmul.f32 %v730, %v711
    %v732 = vmul.f32 %v730, %v712
    %v733 = vadd.f32 %v727, %v731
    %v734 = vadd.f32 %v728, %v732
    %v735 = vmul.f32 %v733, 0.2
    %v736 = vmul.f32 %v734, 0.2
    %v737 = vmax.f32 %v733, %v735
    %v738 = vmax.f32 %v734, %v736
    %v739 = vadd.f32 %v737, %v707
    %v740 = vadd.f32 %v738, %v708
    %v741 = vsel %vm193, %v739, -inf
    %742 = vmax.xlane.f32.xlu0 %v741
    %v743 = vpop.xlane.xlu0 %742
    %v744 = vsel %vm193, %v740, -inf
    %745 = vmax.xlane.f32.xlu0 %v744
    %v746 = vpop.xlane.xlu0 %745
    %v747 = vsub.f32 %v739, %v743
    %v748 = vsub.f32 %v740, %v746
    %v749 = vmul.f32 %v747, 1.442695
    %v750 = vpow.pop %v749
    %v751 = vmul.f32 %v748, 1.442695
    %v752 = vpow.pop %v751
    %v753 = vsel %vm193, %v750, 0.0
    %754 = vadd.xlane.f32.xlu0 %v753
    %v755 = vpop.xlane.xlu0 %754
    %v756 = vsel %vm193, %v752, 0.0
    %757 = vadd.xlane.f32.xlu0 %v756
    %v758 = vpop.xlane.xlu0 %757
    %v759 = vmax.f32 %v755, 1e-20
    %v760 = vmax.f32 %v758, 1e-20
    %v761 = vrcp.pop %v759
    %v762 = vrcp.pop %v760
    %v763 = vmul.f32 %v750, %v761
    %v764 = vmul.f32 %v752, %v762
    %v765 = vpack.c.bf16 %v764, %v763
    %v767 = vlaneseq
    %v768 = vshrl.u32 %v767, 7
    %v769 = vsub.s32 0, %v768
    %v770 = vrot.slane %v566, %v769
    %v773 = vsel %vm193, %v765, 0
    %775 = vmatprep.subr.bf16.mxu0 0
    %776 = vmatpush1.bf16.msra.mxu0 0
    %777 = vmatprep.subr.bf16.mxu0 0
    %778 = vmatpush1.bf16.msra.mxu0 0
    %779 = vmatprep.subr.bf16.mxu0 0
    %780 = vmatpush1.bf16.msra.mxu0 0
    %781 = vmatprep.subr.bf16.mxu0 0
    %782 = vmatpush1.bf16.msra.mxu0 0
    %783 = vmatprep.subr.bf16.mxu0 0
    %784 = vmatpush1.bf16.msra.mxu0 0
    %785 = vmatprep.subr.bf16.mxu0 0
    %786 = vmatpush1.bf16.msra.mxu0 0
    %787 = vmatprep.subr.bf16.mxu0 0
    %788 = vmatpush1.bf16.msra.mxu0 0
    %789 = vmatprep.subr.bf16.mxu0 0
    %790 = vmatpush1.bf16.msra.mxu0 %v612
    %791 = vmatprep.subr.bf16.mxu0 0
    %792 = vmatpush2.bf16.msra.mxu0 0
    %793 = vmatprep.subr.bf16.mxu0 0
    %794 = vmatpush2.bf16.msra.mxu0 0
    %795 = vmatprep.subr.bf16.mxu0 0
    %796 = vmatpush2.bf16.msra.mxu0 0
    %797 = vmatprep.subr.bf16.mxu0 0
    %798 = vmatpush2.bf16.msra.mxu0 0
    %799 = vmatprep.subr.bf16.mxu0 0
    %800 = vmatpush2.bf16.msra.mxu0 0
    %801 = vmatprep.subr.bf16.mxu0 0
    %802 = vmatpush2.bf16.msra.mxu0 0
    %803 = vmatprep.subr.bf16.mxu0 0
    %804 = vmatpush2.bf16.msra.mxu0 0
    %805 = vmatprep.subr.bf16.mxu0 0
    %806 = vmatpush2.bf16.msra.mxu0 0
    %807 = vmatprep.mubr.bf16.mxu0 0
    %808 = vmatmul.mubr.bf16.gmra.mxu0 %v773
    %v809 = vpop.f32.mrf.mxu0
    %v810 = vadd.f32 %v770, %v809
    %v811 = vpop.f32.mrf.mxu0
    %v812 = vpop.f32.mrf.mxu0
    %v813 = vadd.f32 %v770, %v812
    %v814 = vpop.f32.mrf.mxu0
    %815 = vdwg.mxu0
    %816 = vst.msk [vmem:[#allocation2] sm:$0xff] %vm193, %v810
    %817 = vst.msk [vmem:[#allocation2 + $0x8] sm:$0xff] %vm193, %v813
    %v818 = vld [vmem:[#allocation2] sm:$0xff]
    %v819 = vld [vmem:[#allocation2 + $0x8] sm:$0xff]
    %v820 = vld [vmem:[%s31] sm:$0x3]
    %v822 = vsel %vm193, %v820, 0
    %824 = vmatprep.subr.mxu0 0.0
    %825 = vmatpush1.msra.mxu0 0.0
    %826 = vmatprep.subr.mxu0 0.0
    %827 = vmatpush1.msra.mxu0 0.0
    %828 = vmatprep.subr.mxu0 0.0
    %829 = vmatpush1.msra.mxu0 0.0
    %830 = vmatprep.subr.mxu0 0.0
    %831 = vmatpush1.msra.mxu0 0.0
    %832 = vmatprep.subr.mxu0 0.0
    %833 = vmatpush1.msra.mxu0 0.0
    %834 = vmatprep.subr.mxu0 0.0
    %835 = vmatpush1.msra.mxu0 0.0
    %836 = vmatprep.subr.mxu0 0.0
    %837 = vmatpush1.msra.mxu0 0.0
    %838 = vmatprep.subr.mxu0 0.0
    %839 = vmatpush1.msra.mxu0 0.0
    %840 = vmatprep.subr.mxu0 0.0
    %841 = vmatpush1.msra.mxu0 0.0
    %842 = vmatprep.subr.mxu0 0.0
    %843 = vmatpush1.msra.mxu0 0.0
    %844 = vmatprep.subr.mxu0 0.0
    %845 = vmatpush1.msra.mxu0 0.0
    %846 = vmatprep.subr.mxu0 0.0
    %847 = vmatpush1.msra.mxu0 0.0
    %848 = vmatprep.subr.mxu0 0.0
    %849 = vmatpush1.msra.mxu0 0.0
    %850 = vmatprep.subr.mxu0 0.0
    %851 = vmatpush1.msra.mxu0 0.0
    %852 = vmatprep.subr.mxu0 0.0
    %853 = vmatpush1.msra.mxu0 %v819
    %854 = vmatprep.subr.mxu0 0.0
    %855 = vmatpush1.msra.mxu0 %v818
    %856 = vmatprep.subr.mxu0 0.0
    %857 = vmatpush2.msra.mxu0 0.0
    %858 = vmatprep.subr.mxu0 0.0
    %859 = vmatpush2.msra.mxu0 0.0
    %860 = vmatprep.subr.mxu0 0.0
    %861 = vmatpush2.msra.mxu0 0.0
    %862 = vmatprep.subr.mxu0 0.0
    %863 = vmatpush2.msra.mxu0 0.0
    %864 = vmatprep.subr.mxu0 0.0
    %865 = vmatpush2.msra.mxu0 0.0
    %866 = vmatprep.subr.mxu0 0.0
    %867 = vmatpush2.msra.mxu0 0.0
    %868 = vmatprep.subr.mxu0 0.0
    %869 = vmatpush2.msra.mxu0 0.0
    %870 = vmatprep.subr.mxu0 0.0
    %871 = vmatpush2.msra.mxu0 0.0
    %872 = vmatprep.subr.mxu0 0.0
    %873 = vmatpush2.msra.mxu0 0.0
    %874 = vmatprep.subr.mxu0 0.0
    %875 = vmatpush2.msra.mxu0 0.0
    %876 = vmatprep.subr.mxu0 0.0
    %877 = vmatpush2.msra.mxu0 0.0
    %878 = vmatprep.subr.mxu0 0.0
    %879 = vmatpush2.msra.mxu0 0.0
    %880 = vmatprep.subr.mxu0 0.0
    %881 = vmatpush2.msra.mxu0 0.0
    %882 = vmatprep.subr.mxu0 0.0
    %883 = vmatpush2.msra.mxu0 0.0
    %884 = vmatprep.subr.mxu0 0.0
    %885 = vmatpush2.msra.mxu0 0.0
    %886 = vmatprep.subr.mxu0 0.0
    %887 = vmatpush2.msra.mxu0 0.0
    %888 = vmatprep.mubr.f32.mxu0 0.0
    %889 = vmatmul.mubr.f32.gmra.mxu0 %v822
    %v890 = vpop.f32.mrf.mxu0
    %v891 = vadd.f32 0.0, %v890
    %v892 = vpop.f32.mrf.mxu0
    %893 = vdwg.mxu0
    %v894 = vld [vmem:[%s33] sm:$0x3]
    %v895 = vld [vmem:[%s35] sm:$0x1]
    %v896 = vld [vmem:[%s37] sm:$0x1]
    %v898 = vlaneseq
    %v899 = vshrl.u32 %v898, 7
    %v900 = vsub.s32 0, %v899
    %v901 = vrot.slane %v896, %v900
    %vm903 = vcmask 7168
    %v905 = vsel %vm903, %v894, 0
    %vm907 = vcmask 1040384
    %v909 = vsel %vm907, %v895, 0
    %911 = vmatprep.subr.mxu0 0.0
    %912 = vmatpush1.msra.mxu0 0.0
    %913 = vmatprep.subr.mxu0 0.0
    %914 = vmatpush1.msra.mxu0 0.0
    %915 = vmatprep.subr.mxu0 0.0
    %916 = vmatpush1.msra.mxu0 0.0
    %917 = vmatprep.subr.mxu0 0.0
    %918 = vmatpush1.msra.mxu0 0.0
    %919 = vmatprep.subr.mxu0 0.0
    %920 = vmatpush1.msra.mxu0 0.0
    %921 = vmatprep.subr.mxu0 0.0
    %922 = vmatpush1.msra.mxu0 0.0
    %923 = vmatprep.subr.mxu0 0.0
    %924 = vmatpush1.msra.mxu0 0.0
    %925 = vmatprep.subr.mxu0 0.0
    %926 = vmatpush1.msra.mxu0 0.0
    %927 = vmatprep.subr.mxu0 0.0
    %928 = vmatpush1.msra.mxu0 0.0
    %929 = vmatprep.subr.mxu0 0.0
    %930 = vmatpush1.msra.mxu0 0.0
    %931 = vmatprep.subr.mxu0 0.0
    %932 = vmatpush1.msra.mxu0 0.0
    %933 = vmatprep.subr.mxu0 0.0
    %934 = vmatpush1.msra.mxu0 0.0
    %935 = vmatprep.subr.mxu0 0.0
    %936 = vmatpush1.msra.mxu0 0.0
    %937 = vmatprep.subr.mxu0 0.0
    %938 = vmatpush1.msra.mxu0 0.0
    %939 = vmatprep.subr.mxu0 0.0
    %940 = vmatpush1.msra.mxu0 0.0
    %941 = vmatprep.subr.mxu0 0.0
    %942 = vmatpush1.msra.mxu0 %v909
    %943 = vmatprep.subr.mxu0 0.0
    %944 = vmatpush2.msra.mxu0 0.0
    %945 = vmatprep.subr.mxu0 0.0
    %946 = vmatpush2.msra.mxu0 0.0
    %947 = vmatprep.subr.mxu0 0.0
    %948 = vmatpush2.msra.mxu0 0.0
    %949 = vmatprep.subr.mxu0 0.0
    %950 = vmatpush2.msra.mxu0 0.0
    %951 = vmatprep.subr.mxu0 0.0
    %952 = vmatpush2.msra.mxu0 0.0
    %953 = vmatprep.subr.mxu0 0.0
    %954 = vmatpush2.msra.mxu0 0.0
    %955 = vmatprep.subr.mxu0 0.0
    %956 = vmatpush2.msra.mxu0 0.0
    %957 = vmatprep.subr.mxu0 0.0
    %958 = vmatpush2.msra.mxu0 0.0
    %959 = vmatprep.subr.mxu0 0.0
    %960 = vmatpush2.msra.mxu0 0.0
    %961 = vmatprep.subr.mxu0 0.0
    %962 = vmatpush2.msra.mxu0 0.0
    %963 = vmatprep.subr.mxu0 0.0
    %964 = vmatpush2.msra.mxu0 0.0
    %965 = vmatprep.subr.mxu0 0.0
    %966 = vmatpush2.msra.mxu0 0.0
    %967 = vmatprep.subr.mxu0 0.0
    %968 = vmatpush2.msra.mxu0 0.0
    %969 = vmatprep.subr.mxu0 0.0
    %970 = vmatpush2.msra.mxu0 0.0
    %971 = vmatprep.subr.mxu0 0.0
    %972 = vmatpush2.msra.mxu0 0.0
    %973 = vmatprep.subr.mxu0 0.0
    %974 = vmatpush2.msra.mxu0 0.0
    %975 = vmatprep.mubr.f32.mxu0 0.0
    %976 = vmatmul.mubr.f32.gmra.mxu0 %v905
    %v977 = vpop.f32.mrf.mxu0
    %v978 = vadd.f32 %v901, %v977
    %v979 = vpop.f32.mrf.mxu0
    %980 = vdwg.mxu0
    %v981 = vld [vmem:[%s39] sm:$0x3]
    %v982 = vld [vmem:[%s41] sm:$0x3]
    %vm983 = vcmask 15360
    %v985 = vsel %vm983, %v981, 0
    %v988 = vsel %vm142, %v982, 0
    %990 = vmatprep.subr.mxu0 0.0
    %991 = vmatpush1.msra.mxu0 0.0
    %992 = vmatprep.subr.mxu0 0.0
    %993 = vmatpush1.msra.mxu0 0.0
    %994 = vmatprep.subr.mxu0 0.0
    %995 = vmatpush1.msra.mxu0 0.0
    %996 = vmatprep.subr.mxu0 0.0
    %997 = vmatpush1.msra.mxu0 0.0
    %998 = vmatprep.subr.mxu0 0.0
    %999 = vmatpush1.msra.mxu0 0.0
    %1000 = vmatprep.subr.mxu0 0.0
    %1001 = vmatpush1.msra.mxu0 0.0
    %1002 = vmatprep.subr.mxu0 0.0
    %1003 = vmatpush1.msra.mxu0 0.0
    %1004 = vmatprep.subr.mxu0 0.0
    %1005 = vmatpush1.msra.mxu0 0.0
    %1006 = vmatprep.subr.mxu0 0.0
    %1007 = vmatpush1.msra.mxu0 0.0
    %1008 = vmatprep.subr.mxu0 0.0
    %1009 = vmatpush1.msra.mxu0 0.0
    %1010 = vmatprep.subr.mxu0 0.0
    %1011 = vmatpush1.msra.mxu0 0.0
    %1012 = vmatprep.subr.mxu0 0.0
    %1013 = vmatpush1.msra.mxu0 0.0
    %1014 = vmatprep.subr.mxu0 0.0
    %1015 = vmatpush1.msra.mxu0 0.0
    %1016 = vmatprep.subr.mxu0 0.0
    %1017 = vmatpush1.msra.mxu0 0.0
    %1018 = vmatprep.subr.mxu0 0.0
    %1019 = vmatpush1.msra.mxu0 0.0
    %1020 = vmatprep.subr.mxu0 0.0
    %1021 = vmatpush1.msra.mxu0 %v988
    %1022 = vmatprep.subr.mxu0 0.0
    %1023 = vmatpush2.msra.mxu0 0.0
    %1024 = vmatprep.subr.mxu0 0.0
    %1025 = vmatpush2.msra.mxu0 0.0
    %1026 = vmatprep.subr.mxu0 0.0
    %1027 = vmatpush2.msra.mxu0 0.0
    %1028 = vmatprep.subr.mxu0 0.0
    %1029 = vmatpush2.msra.mxu0 0.0
    %1030 = vmatprep.subr.mxu0 0.0
    %1031 = vmatpush2.msra.mxu0 0.0
    %1032 = vmatprep.subr.mxu0 0.0
    %1033 = vmatpush2.msra.mxu0 0.0
    %1034 = vmatprep.subr.mxu0 0.0
    %1035 = vmatpush2.msra.mxu0 0.0
    %1036 = vmatprep.subr.mxu0 0.0
    %1037 = vmatpush2.msra.mxu0 0.0
    %1038 = vmatprep.subr.mxu0 0.0
    %1039 = vmatpush2.msra.mxu0 0.0
    %1040 = vmatprep.subr.mxu0 0.0
    %1041 = vmatpush2.msra.mxu0 0.0
    %1042 = vmatprep.subr.mxu0 0.0
    %1043 = vmatpush2.msra.mxu0 0.0
    %1044 = vmatprep.subr.mxu0 0.0
    %1045 = vmatpush2.msra.mxu0 0.0
    %1046 = vmatprep.subr.mxu0 0.0
    %1047 = vmatpush2.msra.mxu0 0.0
    %1048 = vmatprep.subr.mxu0 0.0
    %1049 = vmatpush2.msra.mxu0 0.0
    %1050 = vmatprep.subr.mxu0 0.0
    %1051 = vmatpush2.msra.mxu0 0.0
    %1052 = vmatprep.subr.mxu0 0.0
    %1053 = vmatpush2.msra.mxu0 0.0
    %1054 = vmatprep.mubr.f32.mxu0 0.0
    %1055 = vmatmul.mubr.f32.gmra.mxu0 %v985
    %v1056 = vpop.f32.mrf.mxu0
    %v1057 = vadd.f32 0.0, %v1056
    %v1058 = vpop.f32.mrf.mxu0
    %1059 = vdwg.mxu0
    %v1060 = vld [vmem:[%s43] sm:$0xff]
    %v1061 = vld [vmem:[%s43 + $0x8] sm:$0xff]
    %v1062 = vld [vmem:[%s45] sm:$0xff]
    %v1063 = vld [vmem:[%s45 + $0x8] sm:$0xff]
    %v1065 = vsel %vm193, %v978, 0
    %1067 = vmatprep.subr.mxu0 0.0
    %1068 = vmatpush1.msra.mxu0 0.0
    %1069 = vmatprep.subr.mxu0 0.0
    %1070 = vmatpush1.msra.mxu0 0.0
    %1071 = vmatprep.subr.mxu0 0.0
    %1072 = vmatpush1.msra.mxu0 0.0
    %1073 = vmatprep.subr.mxu0 0.0
    %1074 = vmatpush1.msra.mxu0 0.0
    %1075 = vmatprep.subr.mxu0 0.0
    %1076 = vmatpush1.msra.mxu0 0.0
    %1077 = vmatprep.subr.mxu0 0.0
    %1078 = vmatpush1.msra.mxu0 0.0
    %1079 = vmatprep.subr.mxu0 0.0
    %1080 = vmatpush1.msra.mxu0 0.0
    %1081 = vmatprep.subr.mxu0 0.0
    %1082 = vmatpush1.msra.mxu0 0.0
    %1083 = vmatprep.subr.mxu0 0.0
    %1084 = vmatpush1.msra.mxu0 0.0
    %1085 = vmatprep.subr.mxu0 0.0
    %1086 = vmatpush1.msra.mxu0 0.0
    %1087 = vmatprep.subr.mxu0 0.0
    %1088 = vmatpush1.msra.mxu0 0.0
    %1089 = vmatprep.subr.mxu0 0.0
    %1090 = vmatpush1.msra.mxu0 0.0
    %1091 = vmatprep.subr.mxu0 0.0
    %1092 = vmatpush1.msra.mxu0 0.0
    %1093 = vmatprep.subr.mxu0 0.0
    %1094 = vmatpush1.msra.mxu0 0.0
    %1095 = vmatprep.subr.mxu0 0.0
    %1096 = vmatpush1.msra.mxu0 %v1063
    %1097 = vmatprep.subr.mxu0 0.0
    %1098 = vmatpush1.msra.mxu0 %v1062
    %1099 = vmatprep.subr.mxu0 0.0
    %1100 = vmatpush2.msra.mxu0 0.0
    %1101 = vmatprep.subr.mxu0 0.0
    %1102 = vmatpush2.msra.mxu0 0.0
    %1103 = vmatprep.subr.mxu0 0.0
    %1104 = vmatpush2.msra.mxu0 0.0
    %1105 = vmatprep.subr.mxu0 0.0
    %1106 = vmatpush2.msra.mxu0 0.0
    %1107 = vmatprep.subr.mxu0 0.0
    %1108 = vmatpush2.msra.mxu0 0.0
    %1109 = vmatprep.subr.mxu0 0.0
    %1110 = vmatpush2.msra.mxu0 0.0
    %1111 = vmatprep.subr.mxu0 0.0
    %1112 = vmatpush2.msra.mxu0 0.0
    %1113 = vmatprep.subr.mxu0 0.0
    %1114 = vmatpush2.msra.mxu0 0.0
    %1115 = vmatprep.subr.mxu0 0.0
    %1116 = vmatpush2.msra.mxu0 0.0
    %1117 = vmatprep.subr.mxu0 0.0
    %1118 = vmatpush2.msra.mxu0 0.0
    %1119 = vmatprep.subr.mxu0 0.0
    %1120 = vmatpush2.msra.mxu0 0.0
    %1121 = vmatprep.subr.mxu0 0.0
    %1122 = vmatpush2.msra.mxu0 0.0
    %1123 = vmatprep.subr.mxu0 0.0
    %1124 = vmatpush2.msra.mxu0 0.0
    %1125 = vmatprep.subr.mxu0 0.0
    %1126 = vmatpush2.msra.mxu0 0.0
    %1127 = vmatprep.subr.mxu0 0.0
    %1128 = vmatpush2.msra.mxu0 0.0
    %1129 = vmatprep.subr.mxu0 0.0
    %1130 = vmatpush2.msra.mxu0 0.0
    %1131 = vmatprep.mubr.f32.mxu0 0.0
    %1132 = vmatmul.mubr.f32.gmra.mxu0 %v1065
    %v1133 = vpop.f32.mrf.mxu0
    %v1134 = vadd.f32 0.0, %v1133
    %v1135 = vpop.f32.mrf.mxu0
    %1136 = vdwg.mxu0
    %v1138 = vsel %vm193, %v891, 0
    %1140 = vmatprep.subr.mxu0 0.0
    %1141 = vmatpush1.msra.mxu0 0.0
    %1142 = vmatprep.subr.mxu0 0.0
    %1143 = vmatpush1.msra.mxu0 0.0
    %1144 = vmatprep.subr.mxu0 0.0
    %1145 = vmatpush1.msra.mxu0 0.0
    %1146 = vmatprep.subr.mxu0 0.0
    %1147 = vmatpush1.msra.mxu0 0.0
    %1148 = vmatprep.subr.mxu0 0.0
    %1149 = vmatpush1.msra.mxu0 0.0
    %1150 = vmatprep.subr.mxu0 0.0
    %1151 = vmatpush1.msra.mxu0 0.0
    %1152 = vmatprep.subr.mxu0 0.0
    %1153 = vmatpush1.msra.mxu0 0.0
    %1154 = vmatprep.subr.mxu0 0.0
    %1155 = vmatpush1.msra.mxu0 0.0
    %1156 = vmatprep.subr.mxu0 0.0
    %1157 = vmatpush1.msra.mxu0 0.0
    %1158 = vmatprep.subr.mxu0 0.0
    %1159 = vmatpush1.msra.mxu0 0.0
    %1160 = vmatprep.subr.mxu0 0.0
    %1161 = vmatpush1.msra.mxu0 0.0
    %1162 = vmatprep.subr.mxu0 0.0
    %1163 = vmatpush1.msra.mxu0 0.0
    %1164 = vmatprep.subr.mxu0 0.0
    %1165 = vmatpush1.msra.mxu0 0.0
    %1166 = vmatprep.subr.mxu0 0.0
    %1167 = vmatpush1.msra.mxu0 0.0
    %1168 = vmatprep.subr.mxu0 0.0
    %1169 = vmatpush1.msra.mxu0 %v1061
    %1170 = vmatprep.subr.mxu0 0.0
    %1171 = vmatpush1.msra.mxu0 %v1060
    %1172 = vmatprep.subr.mxu0 0.0
    %1173 = vmatpush2.msra.mxu0 0.0
    %1174 = vmatprep.subr.mxu0 0.0
    %1175 = vmatpush2.msra.mxu0 0.0
    %1176 = vmatprep.subr.mxu0 0.0
    %1177 = vmatpush2.msra.mxu0 0.0
    %1178 = vmatprep.subr.mxu0 0.0
    %1179 = vmatpush2.msra.mxu0 0.0
    %1180 = vmatprep.subr.mxu0 0.0
    %1181 = vmatpush2.msra.mxu0 0.0
    %1182 = vmatprep.subr.mxu0 0.0
    %1183 = vmatpush2.msra.mxu0 0.0
    %1184 = vmatprep.subr.mxu0 0.0
    %1185 = vmatpush2.msra.mxu0 0.0
    %1186 = vmatprep.subr.mxu0 0.0
    %1187 = vmatpush2.msra.mxu0 0.0
    %1188 = vmatprep.subr.mxu0 0.0
    %1189 = vmatpush2.msra.mxu0 0.0
    %1190 = vmatprep.subr.mxu0 0.0
    %1191 = vmatpush2.msra.mxu0 0.0
    %1192 = vmatprep.subr.mxu0 0.0
    %1193 = vmatpush2.msra.mxu0 0.0
    %1194 = vmatprep.subr.mxu0 0.0
    %1195 = vmatpush2.msra.mxu0 0.0
    %1196 = vmatprep.subr.mxu0 0.0
    %1197 = vmatpush2.msra.mxu0 0.0
    %1198 = vmatprep.subr.mxu0 0.0
    %1199 = vmatpush2.msra.mxu0 0.0
    %1200 = vmatprep.subr.mxu0 0.0
    %1201 = vmatpush2.msra.mxu0 0.0
    %1202 = vmatprep.subr.mxu0 0.0
    %1203 = vmatpush2.msra.mxu0 0.0
    %1204 = vmatprep.mubr.f32.mxu0 0.0
    %1205 = vmatmul.mubr.f32.gmra.mxu0 %v1138
    %v1206 = vpop.f32.mrf.mxu0
    %v1207 = vadd.f32 %v1134, %v1206
    %v1208 = vpop.f32.mrf.mxu0
    %1209 = vdwg.mxu0
    %v1210 = vld [vmem:[%s47] sm:$0xff]
    %v1211 = vld [vmem:[%s47 + $0x8] sm:$0xff]
    %v1213 = vsel %vm193, %v1057, 0
    %1215 = vmatprep.subr.mxu0 0.0
    %1216 = vmatpush1.msra.mxu0 0.0
    %1217 = vmatprep.subr.mxu0 0.0
    %1218 = vmatpush1.msra.mxu0 0.0
    %1219 = vmatprep.subr.mxu0 0.0
    %1220 = vmatpush1.msra.mxu0 0.0
    %1221 = vmatprep.subr.mxu0 0.0
    %1222 = vmatpush1.msra.mxu0 0.0
    %1223 = vmatprep.subr.mxu0 0.0
    %1224 = vmatpush1.msra.mxu0 0.0
    %1225 = vmatprep.subr.mxu0 0.0
    %1226 = vmatpush1.msra.mxu0 0.0
    %1227 = vmatprep.subr.mxu0 0.0
    %1228 = vmatpush1.msra.mxu0 0.0
    %1229 = vmatprep.subr.mxu0 0.0
    %1230 = vmatpush1.msra.mxu0 0.0
    %1231 = vmatprep.subr.mxu0 0.0
    %1232 = vmatpush1.msra.mxu0 0.0
    %1233 = vmatprep.subr.mxu0 0.0
    %1234 = vmatpush1.msra.mxu0 0.0
    %1235 = vmatprep.subr.mxu0 0.0
    %1236 = vmatpush1.msra.mxu0 0.0
    %1237 = vmatprep.subr.mxu0 0.0
    %1238 = vmatpush1.msra.mxu0 0.0
    %1239 = vmatprep.subr.mxu0 0.0
    %1240 = vmatpush1.msra.mxu0 0.0
    %1241 = vmatprep.subr.mxu0 0.0
    %1242 = vmatpush1.msra.mxu0 0.0
    %1243 = vmatprep.subr.mxu0 0.0
    %1244 = vmatpush1.msra.mxu0 %v1211
    %1245 = vmatprep.subr.mxu0 0.0
    %1246 = vmatpush1.msra.mxu0 %v1210
    %1247 = vmatprep.subr.mxu0 0.0
    %1248 = vmatpush2.msra.mxu0 0.0
    %1249 = vmatprep.subr.mxu0 0.0
    %1250 = vmatpush2.msra.mxu0 0.0
    %1251 = vmatprep.subr.mxu0 0.0
    %1252 = vmatpush2.msra.mxu0 0.0
    %1253 = vmatprep.subr.mxu0 0.0
    %1254 = vmatpush2.msra.mxu0 0.0
    %1255 = vmatprep.subr.mxu0 0.0
    %1256 = vmatpush2.msra.mxu0 0.0
    %1257 = vmatprep.subr.mxu0 0.0
    %1258 = vmatpush2.msra.mxu0 0.0
    %1259 = vmatprep.subr.mxu0 0.0
    %1260 = vmatpush2.msra.mxu0 0.0
    %1261 = vmatprep.subr.mxu0 0.0
    %1262 = vmatpush2.msra.mxu0 0.0
    %1263 = vmatprep.subr.mxu0 0.0
    %1264 = vmatpush2.msra.mxu0 0.0
    %1265 = vmatprep.subr.mxu0 0.0
    %1266 = vmatpush2.msra.mxu0 0.0
    %1267 = vmatprep.subr.mxu0 0.0
    %1268 = vmatpush2.msra.mxu0 0.0
    %1269 = vmatprep.subr.mxu0 0.0
    %1270 = vmatpush2.msra.mxu0 0.0
    %1271 = vmatprep.subr.mxu0 0.0
    %1272 = vmatpush2.msra.mxu0 0.0
    %1273 = vmatprep.subr.mxu0 0.0
    %1274 = vmatpush2.msra.mxu0 0.0
    %1275 = vmatprep.subr.mxu0 0.0
    %1276 = vmatpush2.msra.mxu0 0.0
    %1277 = vmatprep.subr.mxu0 0.0
    %1278 = vmatpush2.msra.mxu0 0.0
    %1279 = vmatprep.mubr.f32.mxu0 0.0
    %1280 = vmatmul.mubr.f32.gmra.mxu0 %v1213
    %v1281 = vpop.f32.mrf.mxu0
    %v1282 = vadd.f32 0.0, %v1281
    %v1283 = vpop.f32.mrf.mxu0
    %1284 = vdwg.mxu0
    %v1285 = vadd.f32 %v1207, %v1282
    %v1286 = vld [vmem:[%s49] sm:$0x1]
    %v1288 = vlaneseq
    %v1289 = vshrl.u32 %v1288, 7
    %v1290 = vsub.s32 0, %v1289
    %v1291 = vrot.slane %v1286, %v1290
    %v1293 = vadd.f32 %v1285, %v1291
    %v1294 = vmax.f32 %v1293, 0.0
    %v1295 = vld [vmem:[%s51] sm:$0xf]
    %v1296 = vld [vmem:[%s53] sm:$0x1]
    %v1298 = vlaneseq
    %v1299 = vshrl.u32 %v1298, 7
    %v1300 = vsub.s32 0, %v1299
    %v1301 = vrot.slane %v1296, %v1300
    %v1304 = vsel %vm138, %v1294, 0
    %vm1306 = vcmask 1043456
    %v1308 = vsel %vm1306, %v1295, 0
    %1310 = vmatprep.subr.mxu0 0.0
    %1311 = vmatpush1.msra.mxu0 0.0
    %1312 = vmatprep.subr.mxu0 0.0
    %1313 = vmatpush1.msra.mxu0 0.0
    %1314 = vmatprep.subr.mxu0 0.0
    %1315 = vmatpush1.msra.mxu0 0.0
    %1316 = vmatprep.subr.mxu0 0.0
    %1317 = vmatpush1.msra.mxu0 0.0
    %1318 = vmatprep.subr.mxu0 0.0
    %1319 = vmatpush1.msra.mxu0 0.0
    %1320 = vmatprep.subr.mxu0 0.0
    %1321 = vmatpush1.msra.mxu0 0.0
    %1322 = vmatprep.subr.mxu0 0.0
    %1323 = vmatpush1.msra.mxu0 0.0
    %1324 = vmatprep.subr.mxu0 0.0
    %1325 = vmatpush1.msra.mxu0 0.0
    %1326 = vmatprep.subr.mxu0 0.0
    %1327 = vmatpush1.msra.mxu0 0.0
    %1328 = vmatprep.subr.mxu0 0.0
    %1329 = vmatpush1.msra.mxu0 0.0
    %1330 = vmatprep.subr.mxu0 0.0
    %1331 = vmatpush1.msra.mxu0 0.0
    %1332 = vmatprep.subr.mxu0 0.0
    %1333 = vmatpush1.msra.mxu0 0.0
    %1334 = vmatprep.subr.mxu0 0.0
    %1335 = vmatpush1.msra.mxu0 0.0
    %1336 = vmatprep.subr.mxu0 0.0
    %1337 = vmatpush1.msra.mxu0 0.0
    %1338 = vmatprep.subr.mxu0 0.0
    %1339 = vmatpush1.msra.mxu0 0.0
    %1340 = vmatprep.subr.mxu0 0.0
    %1341 = vmatpush1.msra.mxu0 %v1308
    %1342 = vmatprep.subr.mxu0 0.0
    %1343 = vmatpush2.msra.mxu0 0.0
    %1344 = vmatprep.subr.mxu0 0.0
    %1345 = vmatpush2.msra.mxu0 0.0
    %1346 = vmatprep.subr.mxu0 0.0
    %1347 = vmatpush2.msra.mxu0 0.0
    %1348 = vmatprep.subr.mxu0 0.0
    %1349 = vmatpush2.msra.mxu0 0.0
    %1350 = vmatprep.subr.mxu0 0.0
    %1351 = vmatpush2.msra.mxu0 0.0
    %1352 = vmatprep.subr.mxu0 0.0
    %1353 = vmatpush2.msra.mxu0 0.0
    %1354 = vmatprep.subr.mxu0 0.0
    %1355 = vmatpush2.msra.mxu0 0.0
    %1356 = vmatprep.subr.mxu0 0.0
    %1357 = vmatpush2.msra.mxu0 0.0
    %1358 = vmatprep.subr.mxu0 0.0
    %1359 = vmatpush2.msra.mxu0 0.0
    %1360 = vmatprep.subr.mxu0 0.0
    %1361 = vmatpush2.msra.mxu0 0.0
    %1362 = vmatprep.subr.mxu0 0.0
    %1363 = vmatpush2.msra.mxu0 0.0
    %1364 = vmatprep.subr.mxu0 0.0
    %1365 = vmatpush2.msra.mxu0 0.0
    %1366 = vmatprep.subr.mxu0 0.0
    %1367 = vmatpush2.msra.mxu0 0.0
    %1368 = vmatprep.subr.mxu0 0.0
    %1369 = vmatpush2.msra.mxu0 0.0
    %1370 = vmatprep.subr.mxu0 0.0
    %1371 = vmatpush2.msra.mxu0 0.0
    %1372 = vmatprep.subr.mxu0 0.0
    %1373 = vmatpush2.msra.mxu0 0.0
    %1374 = vmatprep.mubr.f32.mxu0 0.0
    %1375 = vmatmul.mubr.f32.gmra.mxu0 %v1304
    %v1376 = vpop.f32.mrf.mxu0
    %v1377 = vadd.f32 %v1301, %v1376
    %v1378 = vpop.f32.mrf.mxu0
    %1379 = vdwg.mxu0
    %v1380 = vmax.f32 %v1377, 0.0
    %v1381 = vld [vmem:[%s55] sm:$0x3]
    %v1382 = vld [vmem:[%s57] sm:$0x1]
    %v1384 = vlaneseq
    %v1385 = vshrl.u32 %v1384, 7
    %v1386 = vsub.s32 0, %v1385
    %v1387 = vrot.slane %v1382, %v1386
    %v1390 = vsel %vm983, %v1380, 0
    %v1393 = vsel %vm142, %v1381, 0
    %1395 = vmatprep.subr.mxu0 0.0
    %1396 = vmatpush1.msra.mxu0 0.0
    %1397 = vmatprep.subr.mxu0 0.0
    %1398 = vmatpush1.msra.mxu0 0.0
    %1399 = vmatprep.subr.mxu0 0.0
    %1400 = vmatpush1.msra.mxu0 0.0
    %1401 = vmatprep.subr.mxu0 0.0
    %1402 = vmatpush1.msra.mxu0 0.0
    %1403 = vmatprep.subr.mxu0 0.0
    %1404 = vmatpush1.msra.mxu0 0.0
    %1405 = vmatprep.subr.mxu0 0.0
    %1406 = vmatpush1.msra.mxu0 0.0
    %1407 = vmatprep.subr.mxu0 0.0
    %1408 = vmatpush1.msra.mxu0 0.0
    %1409 = vmatprep.subr.mxu0 0.0
    %1410 = vmatpush1.msra.mxu0 0.0
    %1411 = vmatprep.subr.mxu0 0.0
    %1412 = vmatpush1.msra.mxu0 0.0
    %1413 = vmatprep.subr.mxu0 0.0
    %1414 = vmatpush1.msra.mxu0 0.0
    %1415 = vmatprep.subr.mxu0 0.0
    %1416 = vmatpush1.msra.mxu0 0.0
    %1417 = vmatprep.subr.mxu0 0.0
    %1418 = vmatpush1.msra.mxu0 0.0
    %1419 = vmatprep.subr.mxu0 0.0
    %1420 = vmatpush1.msra.mxu0 0.0
    %1421 = vmatprep.subr.mxu0 0.0
    %1422 = vmatpush1.msra.mxu0 0.0
    %1423 = vmatprep.subr.mxu0 0.0
    %1424 = vmatpush1.msra.mxu0 0.0
    %1425 = vmatprep.subr.mxu0 0.0
    %1426 = vmatpush1.msra.mxu0 %v1393
    %1427 = vmatprep.subr.mxu0 0.0
    %1428 = vmatpush2.msra.mxu0 0.0
    %1429 = vmatprep.subr.mxu0 0.0
    %1430 = vmatpush2.msra.mxu0 0.0
    %1431 = vmatprep.subr.mxu0 0.0
    %1432 = vmatpush2.msra.mxu0 0.0
    %1433 = vmatprep.subr.mxu0 0.0
    %1434 = vmatpush2.msra.mxu0 0.0
    %1435 = vmatprep.subr.mxu0 0.0
    %1436 = vmatpush2.msra.mxu0 0.0
    %1437 = vmatprep.subr.mxu0 0.0
    %1438 = vmatpush2.msra.mxu0 0.0
    %1439 = vmatprep.subr.mxu0 0.0
    %1440 = vmatpush2.msra.mxu0 0.0
    %1441 = vmatprep.subr.mxu0 0.0
    %1442 = vmatpush2.msra.mxu0 0.0
    %1443 = vmatprep.subr.mxu0 0.0
    %1444 = vmatpush2.msra.mxu0 0.0
    %1445 = vmatprep.subr.mxu0 0.0
    %1446 = vmatpush2.msra.mxu0 0.0
    %1447 = vmatprep.subr.mxu0 0.0
    %1448 = vmatpush2.msra.mxu0 0.0
    %1449 = vmatprep.subr.mxu0 0.0
    %1450 = vmatpush2.msra.mxu0 0.0
    %1451 = vmatprep.subr.mxu0 0.0
    %1452 = vmatpush2.msra.mxu0 0.0
    %1453 = vmatprep.subr.mxu0 0.0
    %1454 = vmatpush2.msra.mxu0 0.0
    %1455 = vmatprep.subr.mxu0 0.0
    %1456 = vmatpush2.msra.mxu0 0.0
    %1457 = vmatprep.subr.mxu0 0.0
    %1458 = vmatpush2.msra.mxu0 0.0
    %1459 = vmatprep.mubr.f32.mxu0 0.0
    %1460 = vmatmul.mubr.f32.gmra.mxu0 %v1390
    %v1461 = vpop.f32.mrf.mxu0
    %v1462 = vadd.f32 %v1387, %v1461
    %v1463 = vpop.f32.mrf.mxu0
    %1464 = vdwg.mxu0
    %vm1465 = vcmask 17408
    %1466 = vst.msk [vmem:[#allocation4] sm:$0x3] %vm1465, %v1462
    // Predicated region
    $region118: #{tpu_custom_call.1} parent=1 // pred_check
      _
    $region119: #{tpu_custom_call.1} parent=1 // pred_check_branch
      %1468 = sbr.rel (0) target = $region121
    $region120: #{tpu_custom_call.1} parent=1 // pred_region
      %s1470 = ssub.s32 32, 32
      %1471 = vsyncadd [#allocation5], %s1470
      %s1473 = sshll.u32 [#allocation4], 4
      %s1474 = int_to_ptr.vmem [resolvable:$true] %s1473
      %1476 = dma.vmem_to_hbm [thread:$0]  %s1474, 32, %s59, [#allocation5]
    $region121: #{tpu_custom_call.1} parent=1 // pred_fallthru
      _
    // Predicated region
    $region122: #{tpu_custom_call.1} parent=1 // pred_check
      _
    $region123: #{tpu_custom_call.1} parent=1 // pred_check_branch
      %1478 = sbr.rel (0) target = $region125
    $region124: #{tpu_custom_call.1} parent=1 // pred_region
      %1479 = dma.done [#allocation5], 32
    $region125: #{tpu_custom_call.1} parent=1 // pred_fallthru
      _
    %1480 = vsyncpa [#allocation5], 1

</llo_original>
